<compile_context>
chip_gen: v7x
topology: tpu7x:2x2x1
jax: 0.10.0
libtpu: 0.0.40
codegen_flags: <defaults>
</compile_context>

<pallas_src>
import functools

import jax
import jax.numpy as jnp
from jax.experimental import pallas as pl
from jax.experimental.pallas import tpu as pltpu


def _pad128(n):
    return ((n + 127) // 128) * 128


def _relu6(v):
    return jnp.minimum(jnp.maximum(v, 0.0), 6.0)


def _slg_kernel(B, S, D, K, dzp,
                x_ref, mask_ref, eps_ref, w1_ref, w_ref, b_ref, out_ref):
    # ---- embedding Linear(dim_in -> D) + ReLU on the VPU (K is tiny) ----
    x = x_ref[...]                                   # (B*S, K) f32
    w1 = w1_ref[...]                                 # (K, D)   f32
    acc = x[:, 0:1] * w1[0:1, :]                     # broadcast-FMA chain, K static & tiny
    for k in range(1, K):
        acc = acc + x[:, k:k + 1] * w1[k:k + 1, :]
    emb = jnp.maximum(acc + b_ref[0:1, :D], 0.0)     # (B*S, D); Dropout = identity
    # row b*S + s of emb == agent b, time s (x was reshaped (B, S, K) -> (B*S, K))

    # ---- social masked max over agents + mean over time ----
    # pooled[i, d] = (1/S) * sum_s max_j emb[j, s, d] * mask[i, j]
    # mask scalar splats come straight from SMEM; pure VALU vmul/vmax per (i, j).
    inv_s = 1.0 / S
    rows = []
    for i in range(B):
        run = emb[0:S, :] * mask_ref[i, 0]
        for j in range(1, B):
            run = jnp.maximum(run, emb[j * S:(j + 1) * S, :] * mask_ref[i, j])
        rows.append(jnp.sum(run, axis=0, keepdims=True) * inv_s)     # (1, D)
    pooled = jnp.concatenate(rows, axis=0)                           # (B, D) f32

    # ---- latent MLP: f32 operands, f32 MXU accumulation ----
    h1 = _relu6(jnp.dot(pooled, w_ref[0][:D, :],
                        preferred_element_type=jnp.float32) + b_ref[1:2, :])
    h2 = _relu6(jnp.dot(h1, w_ref[1],
                        preferred_element_type=jnp.float32) + b_ref[2:3, :])
    lat = _relu6(jnp.dot(h2, w_ref[2],
                         preferred_element_type=jnp.float32) + b_ref[3:4, :])
    # lat is (B, P): mu at lanes [0:dz], log_var at lanes [dzp:dzp+dz] (wrapper rearranged w4/b4)

    mu_slab = lat[:, :dzp]                           # (B, dzp), vreg-aligned lane slice
    lv_slab = lat[:, dzp:2 * dzp]                    # (B, dzp), vreg-aligned lane slice
    z_slab = eps_ref[...] * jnp.exp(0.5 * lv_slab) + mu_slab   # exp -> EUP slot

    out_ref[0] = z_slab                              # single lane-dense (3, B, dzp) slab
    out_ref[1] = mu_slab
    out_ref[2] = lv_slab


def social_latent_generator(x, batch_mask, params, eps, *, dim_z):
    """x: (B, S, dim_in) f32, batch_mask: (B, B) f32, eps: (B, dim_z) f32."""
    B, S, dim_in = x.shape
    w1, b1, w2, b2, w3, b3, w4, b4 = params
    D = w1.shape[1]
    dff = w2.shape[1]
    dzp = _pad128(dim_z)
    P = max(_pad128(D), _pad128(dff), 2 * dzp)       # one lane-dense width for all slabs

    f32 = jnp.float32
    x2d = x.reshape(B * S, dim_in).astype(f32)
    mask = batch_mask.astype(f32)
    eps_pad = jnp.zeros((B, dzp), f32).at[:, :dim_z].set(eps.astype(f32))

    # Stacked weight / bias slabs. Zero padding is mathematically inert (padded bias
    # entries are 0, relu6(0)=0, padded weight rows multiply zero activations).
    # w4/b4 columns rearranged: mu -> lanes [0:dz], log_var -> lanes [dzp:dzp+dz].
    w_stack = jnp.zeros((3, P, P), f32)
    w_stack = w_stack.at[0, :D, :dff].set(w2.astype(f32))
    w_stack = w_stack.at[1, :dff, :dff].set(w3.astype(f32))
    w_stack = w_stack.at[2, :dff, :dim_z].set(w4[:, :dim_z].astype(f32))
    w_stack = w_stack.at[2, :dff, dzp:dzp + dim_z].set(w4[:, dim_z:].astype(f32))

    b_stack = jnp.zeros((4, P), f32)
    b_stack = b_stack.at[0, :D].set(b1.astype(f32))
    b_stack = b_stack.at[1, :dff].set(b2.astype(f32))
    b_stack = b_stack.at[2, :dff].set(b3.astype(f32))
    b_stack = b_stack.at[3, :dim_z].set(b4[:dim_z].astype(f32))
    b_stack = b_stack.at[3, dzp:dzp + dim_z].set(b4[dim_z:].astype(f32))

    kernel = functools.partial(_slg_kernel, B, S, D, dim_in, dzp)

    vmem = pl.BlockSpec(memory_space=pltpu.MemorySpace.VMEM)
    smem = pl.BlockSpec(memory_space=pltpu.MemorySpace.SMEM)

    out = pl.pallas_call(
        kernel,
        out_shape=jax.ShapeDtypeStruct((3, B, dzp), f32),
        in_specs=[vmem, smem, vmem, vmem, vmem, vmem],
        out_specs=vmem,
    )(x2d, mask, eps_pad, w1.astype(f32), w_stack, b_stack)

    z = out[0, :, :dim_z]
    mu = out[1, :, :dim_z]
    log_var = out[2, :, :dim_z]
    return z, mu, log_var


def _reference(x, batch_mask, params, eps, dim_z):
    """Pure-JAX reference mirroring the PyTorch forward (eval mode)."""
    w1, b1, w2, b2, w3, b3, w4, b4 = params
    emb = jnp.maximum(jnp.einsum("bsk,kd->bsd", x, w1) + b1, 0.0)        # (B, S, D)
    masked = emb[None, :, :, :] * batch_mask[:, :, None, None]           # (i, j, s, d)
    pooled = jnp.mean(jnp.max(masked, axis=1), axis=1)                   # (i, d)
    h1 = _relu6(pooled @ w2 + b2)
    h2 = _relu6(h1 @ w3 + b3)
    lat = _relu6(h2 @ w4 + b4)
    mu = lat[:, :dim_z]
    log_var = lat[:, dim_z:]
    z = eps * jnp.exp(0.5 * log_var) + mu
    return z, mu, log_var


def init_params(key, dim_in, d_model, dff, dim_z):
    ks = jax.random.split(key, 8)
    scale = 0.05
    w1 = scale * jax.random.normal(ks[0], (dim_in, d_model), jnp.float32)
    b1 = scale * jax.random.normal(ks[1], (d_model,), jnp.float32)
    w2 = scale * jax.random.normal(ks[2], (d_model, dff), jnp.float32)
    b2 = scale * jax.random.normal(ks[3], (dff,), jnp.float32)
    w3 = scale * jax.random.normal(ks[4], (dff, dff), jnp.float32)
    b3 = scale * jax.random.normal(ks[5], (dff,), jnp.float32)
    w4 = scale * jax.random.normal(ks[6], (dff, 2 * dim_z), jnp.float32)
    b4 = scale * jax.random.normal(ks[7], (2 * dim_z,), jnp.float32)
    return (w1, b1, w2, b2, w3, b3, w4, b4)


if __name__ == "__main__":
    # small shapes consistent with the module's forward
    B = 8        # batch_size (number of agents)
    S = 8        # seq_len
    DIM_IN = 4
    D_MODEL = 128
    DFF = 128
    DIM_Z = 8

    key = jax.random.PRNGKey(0)
    kx, kmask, keps, kparams = jax.random.split(key, 4)

    x = jax.random.normal(kx, (B, S, DIM_IN), jnp.float32)
    batch_mask = (jax.random.uniform(kmask, (B, B)) > 0.3).astype(jnp.float32)
    eps = jax.random.normal(keps, (B, DIM_Z), jnp.float32)
    params = init_params(kparams, DIM_IN, D_MODEL, DFF, DIM_Z)

    z, mu, log_var = social_latent_generator(x, batch_mask, params, eps, dim_z=DIM_Z)
    jax.block_until_ready((z, mu, log_var))

    zr, mur, lvr = _reference(x, batch_mask, params, eps, DIM_Z)
    jax.block_until_ready((zr, mur, lvr))

    assert z.shape == (B, DIM_Z) and mu.shape == (B, DIM_Z) and log_var.shape == (B, DIM_Z)
    assert bool(jnp.all(jnp.isfinite(z))) and bool(jnp.all(jnp.isfinite(log_var)))
    assert bool(jnp.allclose(mu, mur, atol=1e-3, rtol=1e-3))
    assert bool(jnp.allclose(log_var, lvr, atol=1e-3, rtol=1e-3))
    assert bool(jnp.allclose(z, zr, atol=1e-3, rtol=1e-3))
    print("KERNEL_OK")
</pallas_src>

<mosaic_0001>
module attributes {stable_mosaic.version = 11 : i64} {
  func.func @_slg_kernel(%arg0: memref<64x4xf32, #tpu.memory_space<vmem>>, %arg1: memref<8x8xf32, #tpu.memory_space<smem>>, %arg2: memref<8x128xf32, #tpu.memory_space<vmem>>, %arg3: memref<4x128xf32, #tpu.memory_space<vmem>>, %arg4: memref<3x256x256xf32, #tpu.memory_space<vmem>>, %arg5: memref<4x256xf32, #tpu.memory_space<vmem>>, %arg6: memref<3x8x128xf32, #tpu.memory_space<vmem>>) attributes {dimension_semantics = [], scalar_prefetch = 0 : i64, scratch_operands = 0 : i64, tpu.core_type = #tpu.core_type<tc>} {
    %c0 = arith.constant 0 : index
    %c0_0 = arith.constant 0 : index
    %0 = vector.load %arg0[%c0, %c0_0] : memref<64x4xf32, #tpu.memory_space<vmem>>, vector<64x4xf32>
    %c0_1 = arith.constant 0 : index
    %c0_2 = arith.constant 0 : index
    %1 = vector.load %arg3[%c0_1, %c0_2] : memref<4x128xf32, #tpu.memory_space<vmem>>, vector<4x128xf32>
    %2 = vector.extract_strided_slice %0 {offsets = [0, 0], sizes = [64, 1], strides = [1, 1]} : vector<64x4xf32> to vector<64x1xf32>
    %3 = vector.extract_strided_slice %1 {offsets = [0, 0], sizes = [1, 128], strides = [1, 1]} : vector<4x128xf32> to vector<1x128xf32>
    %4 = vector.broadcast %2 : vector<64x1xf32> to vector<64x128xf32>
    %5 = vector.broadcast %3 : vector<1x128xf32> to vector<64x128xf32>
    %6 = arith.mulf %4, %5 : vector<64x128xf32>
    %7 = vector.extract_strided_slice %0 {offsets = [0, 1], sizes = [64, 1], strides = [1, 1]} : vector<64x4xf32> to vector<64x1xf32>
    %8 = vector.extract_strided_slice %1 {offsets = [1, 0], sizes = [1, 128], strides = [1, 1]} : vector<4x128xf32> to vector<1x128xf32>
    %9 = vector.broadcast %7 : vector<64x1xf32> to vector<64x128xf32>
    %10 = vector.broadcast %8 : vector<1x128xf32> to vector<64x128xf32>
    %11 = arith.mulf %9, %10 : vector<64x128xf32>
    %12 = arith.addf %6, %11 : vector<64x128xf32>
    %13 = vector.extract_strided_slice %0 {offsets = [0, 2], sizes = [64, 1], strides = [1, 1]} : vector<64x4xf32> to vector<64x1xf32>
    %14 = vector.extract_strided_slice %1 {offsets = [2, 0], sizes = [1, 128], strides = [1, 1]} : vector<4x128xf32> to vector<1x128xf32>
    %15 = vector.broadcast %13 : vector<64x1xf32> to vector<64x128xf32>
    %16 = vector.broadcast %14 : vector<1x128xf32> to vector<64x128xf32>
    %17 = arith.mulf %15, %16 : vector<64x128xf32>
    %18 = arith.addf %12, %17 : vector<64x128xf32>
    %19 = vector.extract_strided_slice %0 {offsets = [0, 3], sizes = [64, 1], strides = [1, 1]} : vector<64x4xf32> to vector<64x1xf32>
    %20 = vector.extract_strided_slice %1 {offsets = [3, 0], sizes = [1, 128], strides = [1, 1]} : vector<4x128xf32> to vector<1x128xf32>
    %21 = vector.broadcast %19 : vector<64x1xf32> to vector<64x128xf32>
    %22 = vector.broadcast %20 : vector<1x128xf32> to vector<64x128xf32>
    %23 = arith.mulf %21, %22 : vector<64x128xf32>
    %24 = arith.addf %18, %23 : vector<64x128xf32>
    %c0_3 = arith.constant 0 : index
    %c0_4 = arith.constant 0 : index
    %25 = vector.load %arg5[%c0_3, %c0_4] : memref<4x256xf32, #tpu.memory_space<vmem>>, vector<1x128xf32>
    %26 = vector.broadcast %25 : vector<1x128xf32> to vector<64x128xf32>
    %27 = arith.addf %24, %26 : vector<64x128xf32>
    %cst = arith.constant 0.000000e+00 : f32
    %28 = vector.broadcast %cst : f32 to vector<64x128xf32>
    %29 = arith.maximumf %27, %28 : vector<64x128xf32>
    %30 = vector.extract_strided_slice %29 {offsets = [0, 0], sizes = [8, 128], strides = [1, 1]} : vector<64x128xf32> to vector<8x128xf32>
    %c0_5 = arith.constant 0 : index
    %c0_6 = arith.constant 0 : index
    %31 = memref.load %arg1[%c0_5, %c0_6] : memref<8x8xf32, #tpu.memory_space<smem>>
    %32 = vector.broadcast %31 : f32 to vector<8x128xf32>
    %33 = arith.mulf %30, %32 : vector<8x128xf32>
    %34 = vector.extract_strided_slice %29 {offsets = [8, 0], sizes = [8, 128], strides = [1, 1]} : vector<64x128xf32> to vector<8x128xf32>
    %c0_7 = arith.constant 0 : index
    %c1 = arith.constant 1 : index
    %35 = memref.load %arg1[%c0_7, %c1] : memref<8x8xf32, #tpu.memory_space<smem>>
    %36 = vector.broadcast %35 : f32 to vector<8x128xf32>
    %37 = arith.mulf %34, %36 : vector<8x128xf32>
    %38 = arith.maximumf %33, %37 : vector<8x128xf32>
    %39 = vector.extract_strided_slice %29 {offsets = [16, 0], sizes = [8, 128], strides = [1, 1]} : vector<64x128xf32> to vector<8x128xf32>
    %c0_8 = arith.constant 0 : index
    %c2 = arith.constant 2 : index
    %40 = memref.load %arg1[%c0_8, %c2] : memref<8x8xf32, #tpu.memory_space<smem>>
    %41 = vector.broadcast %40 : f32 to vector<8x128xf32>
    %42 = arith.mulf %39, %41 : vector<8x128xf32>
    %43 = arith.maximumf %38, %42 : vector<8x128xf32>
    %44 = vector.extract_strided_slice %29 {offsets = [24, 0], sizes = [8, 128], strides = [1, 1]} : vector<64x128xf32> to vector<8x128xf32>
    %c0_9 = arith.constant 0 : index
    %c3 = arith.constant 3 : index
    %45 = memref.load %arg1[%c0_9, %c3] : memref<8x8xf32, #tpu.memory_space<smem>>
    %46 = vector.broadcast %45 : f32 to vector<8x128xf32>
    %47 = arith.mulf %44, %46 : vector<8x128xf32>
    %48 = arith.maximumf %43, %47 : vector<8x128xf32>
    %49 = vector.extract_strided_slice %29 {offsets = [32, 0], sizes = [8, 128], strides = [1, 1]} : vector<64x128xf32> to vector<8x128xf32>
    %c0_10 = arith.constant 0 : index
    %c4 = arith.constant 4 : index
    %50 = memref.load %arg1[%c0_10, %c4] : memref<8x8xf32, #tpu.memory_space<smem>>
    %51 = vector.broadcast %50 : f32 to vector<8x128xf32>
    %52 = arith.mulf %49, %51 : vector<8x128xf32>
    %53 = arith.maximumf %48, %52 : vector<8x128xf32>
    %54 = vector.extract_strided_slice %29 {offsets = [40, 0], sizes = [8, 128], strides = [1, 1]} : vector<64x128xf32> to vector<8x128xf32>
    %c0_11 = arith.constant 0 : index
    %c5 = arith.constant 5 : index
    %55 = memref.load %arg1[%c0_11, %c5] : memref<8x8xf32, #tpu.memory_space<smem>>
    %56 = vector.broadcast %55 : f32 to vector<8x128xf32>
    %57 = arith.mulf %54, %56 : vector<8x128xf32>
    %58 = arith.maximumf %53, %57 : vector<8x128xf32>
    %59 = vector.extract_strided_slice %29 {offsets = [48, 0], sizes = [8, 128], strides = [1, 1]} : vector<64x128xf32> to vector<8x128xf32>
    %c0_12 = arith.constant 0 : index
    %c6 = arith.constant 6 : index
    %60 = memref.load %arg1[%c0_12, %c6] : memref<8x8xf32, #tpu.memory_space<smem>>
    %61 = vector.broadcast %60 : f32 to vector<8x128xf32>
    %62 = arith.mulf %59, %61 : vector<8x128xf32>
    %63 = arith.maximumf %58, %62 : vector<8x128xf32>
    %64 = vector.extract_strided_slice %29 {offsets = [56, 0], sizes = [8, 128], strides = [1, 1]} : vector<64x128xf32> to vector<8x128xf32>
    %c0_13 = arith.constant 0 : index
    %c7 = arith.constant 7 : index
    %65 = memref.load %arg1[%c0_13, %c7] : memref<8x8xf32, #tpu.memory_space<smem>>
    %66 = vector.broadcast %65 : f32 to vector<8x128xf32>
    %67 = arith.mulf %64, %66 : vector<8x128xf32>
    %68 = arith.maximumf %63, %67 : vector<8x128xf32>
    %cst_14 = arith.constant dense<0.000000e+00> : vector<128xf32>
    %69 = vector.multi_reduction <add>, %68, %cst_14 [0] : vector<8x128xf32> to vector<128xf32>
    %70 = vector.shape_cast %69 : vector<128xf32> to vector<1x128xf32>
    %cst_15 = arith.constant 1.250000e-01 : f32
    %71 = vector.broadcast %cst_15 : f32 to vector<1x128xf32>
    %72 = arith.mulf %70, %71 : vector<1x128xf32>
    %73 = vector.extract_strided_slice %29 {offsets = [0, 0], sizes = [8, 128], strides = [1, 1]} : vector<64x128xf32> to vector<8x128xf32>
    %c1_16 = arith.constant 1 : index
    %c0_17 = arith.constant 0 : index
    %74 = memref.load %arg1[%c1_16, %c0_17] : memref<8x8xf32, #tpu.memory_space<smem>>
    %75 = vector.broadcast %74 : f32 to vector<8x128xf32>
    %76 = arith.mulf %73, %75 : vector<8x128xf32>
    %77 = vector.extract_strided_slice %29 {offsets = [8, 0], sizes = [8, 128], strides = [1, 1]} : vector<64x128xf32> to vector<8x128xf32>
    %c1_18 = arith.constant 1 : index
    %c1_19 = arith.constant 1 : index
    %78 = memref.load %arg1[%c1_18, %c1_19] : memref<8x8xf32, #tpu.memory_space<smem>>
    %79 = vector.broadcast %78 : f32 to vector<8x128xf32>
    %80 = arith.mulf %77, %79 : vector<8x128xf32>
    %81 = arith.maximumf %76, %80 : vector<8x128xf32>
    %82 = vector.extract_strided_slice %29 {offsets = [16, 0], sizes = [8, 128], strides = [1, 1]} : vector<64x128xf32> to vector<8x128xf32>
    %c1_20 = arith.constant 1 : index
    %c2_21 = arith.constant 2 : index
    %83 = memref.load %arg1[%c1_20, %c2_21] : memref<8x8xf32, #tpu.memory_space<smem>>
    %84 = vector.broadcast %83 : f32 to vector<8x128xf32>
    %85 = arith.mulf %82, %84 : vector<8x128xf32>
    %86 = arith.maximumf %81, %85 : vector<8x128xf32>
    %87 = vector.extract_strided_slice %29 {offsets = [24, 0], sizes = [8, 128], strides = [1, 1]} : vector<64x128xf32> to vector<8x128xf32>
    %c1_22 = arith.constant 1 : index
    %c3_23 = arith.constant 3 : index
    %88 = memref.load %arg1[%c1_22, %c3_23] : memref<8x8xf32, #tpu.memory_space<smem>>
    %89 = vector.broadcast %88 : f32 to vector<8x128xf32>
    %90 = arith.mulf %87, %89 : vector<8x128xf32>
    %91 = arith.maximumf %86, %90 : vector<8x128xf32>
    %92 = vector.extract_strided_slice %29 {offsets = [32, 0], sizes = [8, 128], strides = [1, 1]} : vector<64x128xf32> to vector<8x128xf32>
    %c1_24 = arith.constant 1 : index
    %c4_25 = arith.constant 4 : index
    %93 = memref.load %arg1[%c1_24, %c4_25] : memref<8x8xf32, #tpu.memory_space<smem>>
    %94 = vector.broadcast %93 : f32 to vector<8x128xf32>
    %95 = arith.mulf %92, %94 : vector<8x128xf32>
    %96 = arith.maximumf %91, %95 : vector<8x128xf32>
    %97 = vector.extract_strided_slice %29 {offsets = [40, 0], sizes = [8, 128], strides = [1, 1]} : vector<64x128xf32> to vector<8x128xf32>
    %c1_26 = arith.constant 1 : index
    %c5_27 = arith.constant 5 : index
    %98 = memref.load %arg1[%c1_26, %c5_27] : memref<8x8xf32, #tpu.memory_space<smem>>
    %99 = vector.broadcast %98 : f32 to vector<8x128xf32>
    %100 = arith.mulf %97, %99 : vector<8x128xf32>
    %101 = arith.maximumf %96, %100 : vector<8x128xf32>
    %102 = vector.extract_strided_slice %29 {offsets = [48, 0], sizes = [8, 128], strides = [1, 1]} : vector<64x128xf32> to vector<8x128xf32>
    %c1_28 = arith.constant 1 : index
    %c6_29 = arith.constant 6 : index
    %103 = memref.load %arg1[%c1_28, %c6_29] : memref<8x8xf32, #tpu.memory_space<smem>>
    %104 = vector.broadcast %103 : f32 to vector<8x128xf32>
    %105 = arith.mulf %102, %104 : vector<8x128xf32>
    %106 = arith.maximumf %101, %105 : vector<8x128xf32>
    %107 = vector.extract_strided_slice %29 {offsets = [56, 0], sizes = [8, 128], strides = [1, 1]} : vector<64x128xf32> to vector<8x128xf32>
    %c1_30 = arith.constant 1 : index
    %c7_31 = arith.constant 7 : index
    %108 = memref.load %arg1[%c1_30, %c7_31] : memref<8x8xf32, #tpu.memory_space<smem>>
    %109 = vector.broadcast %108 : f32 to vector<8x128xf32>
    %110 = arith.mulf %107, %109 : vector<8x128xf32>
    %111 = arith.maximumf %106, %110 : vector<8x128xf32>
    %cst_32 = arith.constant dense<0.000000e+00> : vector<128xf32>
    %112 = vector.multi_reduction <add>, %111, %cst_32 [0] : vector<8x128xf32> to vector<128xf32>
    %113 = vector.shape_cast %112 : vector<128xf32> to vector<1x128xf32>
    %cst_33 = arith.constant 1.250000e-01 : f32
    %114 = vector.broadcast %cst_33 : f32 to vector<1x128xf32>
    %115 = arith.mulf %113, %114 : vector<1x128xf32>
    %116 = vector.extract_strided_slice %29 {offsets = [0, 0], sizes = [8, 128], strides = [1, 1]} : vector<64x128xf32> to vector<8x128xf32>
    %c2_34 = arith.constant 2 : index
    %c0_35 = arith.constant 0 : index
    %117 = memref.load %arg1[%c2_34, %c0_35] : memref<8x8xf32, #tpu.memory_space<smem>>
    %118 = vector.broadcast %117 : f32 to vector<8x128xf32>
    %119 = arith.mulf %116, %118 : vector<8x128xf32>
    %120 = vector.extract_strided_slice %29 {offsets = [8, 0], sizes = [8, 128], strides = [1, 1]} : vector<64x128xf32> to vector<8x128xf32>
    %c2_36 = arith.constant 2 : index
    %c1_37 = arith.constant 1 : index
    %121 = memref.load %arg1[%c2_36, %c1_37] : memref<8x8xf32, #tpu.memory_space<smem>>
    %122 = vector.broadcast %121 : f32 to vector<8x128xf32>
    %123 = arith.mulf %120, %122 : vector<8x128xf32>
    %124 = arith.maximumf %119, %123 : vector<8x128xf32>
    %125 = vector.extract_strided_slice %29 {offsets = [16, 0], sizes = [8, 128], strides = [1, 1]} : vector<64x128xf32> to vector<8x128xf32>
    %c2_38 = arith.constant 2 : index
    %c2_39 = arith.constant 2 : index
    %126 = memref.load %arg1[%c2_38, %c2_39] : memref<8x8xf32, #tpu.memory_space<smem>>
    %127 = vector.broadcast %126 : f32 to vector<8x128xf32>
    %128 = arith.mulf %125, %127 : vector<8x128xf32>
    %129 = arith.maximumf %124, %128 : vector<8x128xf32>
    %130 = vector.extract_strided_slice %29 {offsets = [24, 0], sizes = [8, 128], strides = [1, 1]} : vector<64x128xf32> to vector<8x128xf32>
    %c2_40 = arith.constant 2 : index
    %c3_41 = arith.constant 3 : index
    %131 = memref.load %arg1[%c2_40, %c3_41] : memref<8x8xf32, #tpu.memory_space<smem>>
    %132 = vector.broadcast %131 : f32 to vector<8x128xf32>
    %133 = arith.mulf %130, %132 : vector<8x128xf32>
    %134 = arith.maximumf %129, %133 : vector<8x128xf32>
    %135 = vector.extract_strided_slice %29 {offsets = [32, 0], sizes = [8, 128], strides = [1, 1]} : vector<64x128xf32> to vector<8x128xf32>
    %c2_42 = arith.constant 2 : index
    %c4_43 = arith.constant 4 : index
    %136 = memref.load %arg1[%c2_42, %c4_43] : memref<8x8xf32, #tpu.memory_space<smem>>
    %137 = vector.broadcast %136 : f32 to vector<8x128xf32>
    %138 = arith.mulf %135, %137 : vector<8x128xf32>
    %139 = arith.maximumf %134, %138 : vector<8x128xf32>
    %140 = vector.extract_strided_slice %29 {offsets = [40, 0], sizes = [8, 128], strides = [1, 1]} : vector<64x128xf32> to vector<8x128xf32>
    %c2_44 = arith.constant 2 : index
    %c5_45 = arith.constant 5 : index
    %141 = memref.load %arg1[%c2_44, %c5_45] : memref<8x8xf32, #tpu.memory_space<smem>>
    %142 = vector.broadcast %141 : f32 to vector<8x128xf32>
    %143 = arith.mulf %140, %142 : vector<8x128xf32>
    %144 = arith.maximumf %139, %143 : vector<8x128xf32>
    %145 = vector.extract_strided_slice %29 {offsets = [48, 0], sizes = [8, 128], strides = [1, 1]} : vector<64x128xf32> to vector<8x128xf32>
    %c2_46 = arith.constant 2 : index
    %c6_47 = arith.constant 6 : index
    %146 = memref.load %arg1[%c2_46, %c6_47] : memref<8x8xf32, #tpu.memory_space<smem>>
    %147 = vector.broadcast %146 : f32 to vector<8x128xf32>
    %148 = arith.mulf %145, %147 : vector<8x128xf32>
    %149 = arith.maximumf %144, %148 : vector<8x128xf32>
    %150 = vector.extract_strided_slice %29 {offsets = [56, 0], sizes = [8, 128], strides = [1, 1]} : vector<64x128xf32> to vector<8x128xf32>
    %c2_48 = arith.constant 2 : index
    %c7_49 = arith.constant 7 : index
    %151 = memref.load %arg1[%c2_48, %c7_49] : memref<8x8xf32, #tpu.memory_space<smem>>
    %152 = vector.broadcast %151 : f32 to vector<8x128xf32>
    %153 = arith.mulf %150, %152 : vector<8x128xf32>
    %154 = arith.maximumf %149, %153 : vector<8x128xf32>
    %cst_50 = arith.constant dense<0.000000e+00> : vector<128xf32>
    %155 = vector.multi_reduction <add>, %154, %cst_50 [0] : vector<8x128xf32> to vector<128xf32>
    %156 = vector.shape_cast %155 : vector<128xf32> to vector<1x128xf32>
    %cst_51 = arith.constant 1.250000e-01 : f32
    %157 = vector.broadcast %cst_51 : f32 to vector<1x128xf32>
    %158 = arith.mulf %156, %157 : vector<1x128xf32>
    %159 = vector.extract_strided_slice %29 {offsets = [0, 0], sizes = [8, 128], strides = [1, 1]} : vector<64x128xf32> to vector<8x128xf32>
    %c3_52 = arith.constant 3 : index
    %c0_53 = arith.constant 0 : index
    %160 = memref.load %arg1[%c3_52, %c0_53] : memref<8x8xf32, #tpu.memory_space<smem>>
    %161 = vector.broadcast %160 : f32 to vector<8x128xf32>
    %162 = arith.mulf %159, %161 : vector<8x128xf32>
    %163 = vector.extract_strided_slice %29 {offsets = [8, 0], sizes = [8, 128], strides = [1, 1]} : vector<64x128xf32> to vector<8x128xf32>
    %c3_54 = arith.constant 3 : index
    %c1_55 = arith.constant 1 : index
    %164 = memref.load %arg1[%c3_54, %c1_55] : memref<8x8xf32, #tpu.memory_space<smem>>
    %165 = vector.broadcast %164 : f32 to vector<8x128xf32>
    %166 = arith.mulf %163, %165 : vector<8x128xf32>
    %167 = arith.maximumf %162, %166 : vector<8x128xf32>
    %168 = vector.extract_strided_slice %29 {offsets = [16, 0], sizes = [8, 128], strides = [1, 1]} : vector<64x128xf32> to vector<8x128xf32>
    %c3_56 = arith.constant 3 : index
    %c2_57 = arith.constant 2 : index
    %169 = memref.load %arg1[%c3_56, %c2_57] : memref<8x8xf32, #tpu.memory_space<smem>>
    %170 = vector.broadcast %169 : f32 to vector<8x128xf32>
    %171 = arith.mulf %168, %170 : vector<8x128xf32>
    %172 = arith.maximumf %167, %171 : vector<8x128xf32>
    %173 = vector.extract_strided_slice %29 {offsets = [24, 0], sizes = [8, 128], strides = [1, 1]} : vector<64x128xf32> to vector<8x128xf32>
    %c3_58 = arith.constant 3 : index
    %c3_59 = arith.constant 3 : index
    %174 = memref.load %arg1[%c3_58, %c3_59] : memref<8x8xf32, #tpu.memory_space<smem>>
    %175 = vector.broadcast %174 : f32 to vector<8x128xf32>
    %176 = arith.mulf %173, %175 : vector<8x128xf32>
    %177 = arith.maximumf %172, %176 : vector<8x128xf32>
    %178 = vector.extract_strided_slice %29 {offsets = [32, 0], sizes = [8, 128], strides = [1, 1]} : vector<64x128xf32> to vector<8x128xf32>
    %c3_60 = arith.constant 3 : index
    %c4_61 = arith.constant 4 : index
    %179 = memref.load %arg1[%c3_60, %c4_61] : memref<8x8xf32, #tpu.memory_space<smem>>
    %180 = vector.broadcast %179 : f32 to vector<8x128xf32>
    %181 = arith.mulf %178, %180 : vector<8x128xf32>
    %182 = arith.maximumf %177, %181 : vector<8x128xf32>
    %183 = vector.extract_strided_slice %29 {offsets = [40, 0], sizes = [8, 128], strides = [1, 1]} : vector<64x128xf32> to vector<8x128xf32>
    %c3_62 = arith.constant 3 : index
    %c5_63 = arith.constant 5 : index
    %184 = memref.load %arg1[%c3_62, %c5_63] : memref<8x8xf32, #tpu.memory_space<smem>>
    %185 = vector.broadcast %184 : f32 to vector<8x128xf32>
    %186 = arith.mulf %183, %185 : vector<8x128xf32>
    %187 = arith.maximumf %182, %186 : vector<8x128xf32>
    %188 = vector.extract_strided_slice %29 {offsets = [48, 0], sizes = [8, 128], strides = [1, 1]} : vector<64x128xf32> to vector<8x128xf32>
    %c3_64 = arith.constant 3 : index
    %c6_65 = arith.constant 6 : index
    %189 = memref.load %arg1[%c3_64, %c6_65] : memref<8x8xf32, #tpu.memory_space<smem>>
    %190 = vector.broadcast %189 : f32 to vector<8x128xf32>
    %191 = arith.mulf %188, %190 : vector<8x128xf32>
    %192 = arith.maximumf %187, %191 : vector<8x128xf32>
    %193 = vector.extract_strided_slice %29 {offsets = [56, 0], sizes = [8, 128], strides = [1, 1]} : vector<64x128xf32> to vector<8x128xf32>
    %c3_66 = arith.constant 3 : index
    %c7_67 = arith.constant 7 : index
    %194 = memref.load %arg1[%c3_66, %c7_67] : memref<8x8xf32, #tpu.memory_space<smem>>
    %195 = vector.broadcast %194 : f32 to vector<8x128xf32>
    %196 = arith.mulf %193, %195 : vector<8x128xf32>
    %197 = arith.maximumf %192, %196 : vector<8x128xf32>
    %cst_68 = arith.constant dense<0.000000e+00> : vector<128xf32>
    %198 = vector.multi_reduction <add>, %197, %cst_68 [0] : vector<8x128xf32> to vector<128xf32>
    %199 = vector.shape_cast %198 : vector<128xf32> to vector<1x128xf32>
    %cst_69 = arith.constant 1.250000e-01 : f32
    %200 = vector.broadcast %cst_69 : f32 to vector<1x128xf32>
    %201 = arith.mulf %199, %200 : vector<1x128xf32>
    %202 = vector.extract_strided_slice %29 {offsets = [0, 0], sizes = [8, 128], strides = [1, 1]} : vector<64x128xf32> to vector<8x128xf32>
    %c4_70 = arith.constant 4 : index
    %c0_71 = arith.constant 0 : index
    %203 = memref.load %arg1[%c4_70, %c0_71] : memref<8x8xf32, #tpu.memory_space<smem>>
    %204 = vector.broadcast %203 : f32 to vector<8x128xf32>
    %205 = arith.mulf %202, %204 : vector<8x128xf32>
    %206 = vector.extract_strided_slice %29 {offsets = [8, 0], sizes = [8, 128], strides = [1, 1]} : vector<64x128xf32> to vector<8x128xf32>
    %c4_72 = arith.constant 4 : index
    %c1_73 = arith.constant 1 : index
    %207 = memref.load %arg1[%c4_72, %c1_73] : memref<8x8xf32, #tpu.memory_space<smem>>
    %208 = vector.broadcast %207 : f32 to vector<8x128xf32>
    %209 = arith.mulf %206, %208 : vector<8x128xf32>
    %210 = arith.maximumf %205, %209 : vector<8x128xf32>
    %211 = vector.extract_strided_slice %29 {offsets = [16, 0], sizes = [8, 128], strides = [1, 1]} : vector<64x128xf32> to vector<8x128xf32>
    %c4_74 = arith.constant 4 : index
    %c2_75 = arith.constant 2 : index
    %212 = memref.load %arg1[%c4_74, %c2_75] : memref<8x8xf32, #tpu.memory_space<smem>>
    %213 = vector.broadcast %212 : f32 to vector<8x128xf32>
    %214 = arith.mulf %211, %213 : vector<8x128xf32>
    %215 = arith.maximumf %210, %214 : vector<8x128xf32>
    %216 = vector.extract_strided_slice %29 {offsets = [24, 0], sizes = [8, 128], strides = [1, 1]} : vector<64x128xf32> to vector<8x128xf32>
    %c4_76 = arith.constant 4 : index
    %c3_77 = arith.constant 3 : index
    %217 = memref.load %arg1[%c4_76, %c3_77] : memref<8x8xf32, #tpu.memory_space<smem>>
    %218 = vector.broadcast %217 : f32 to vector<8x128xf32>
    %219 = arith.mulf %216, %218 : vector<8x128xf32>
    %220 = arith.maximumf %215, %219 : vector<8x128xf32>
    %221 = vector.extract_strided_slice %29 {offsets = [32, 0], sizes = [8, 128], strides = [1, 1]} : vector<64x128xf32> to vector<8x128xf32>
    %c4_78 = arith.constant 4 : index
    %c4_79 = arith.constant 4 : index
    %222 = memref.load %arg1[%c4_78, %c4_79] : memref<8x8xf32, #tpu.memory_space<smem>>
    %223 = vector.broadcast %222 : f32 to vector<8x128xf32>
    %224 = arith.mulf %221, %223 : vector<8x128xf32>
    %225 = arith.maximumf %220, %224 : vector<8x128xf32>
    %226 = vector.extract_strided_slice %29 {offsets = [40, 0], sizes = [8, 128], strides = [1, 1]} : vector<64x128xf32> to vector<8x128xf32>
    %c4_80 = arith.constant 4 : index
    %c5_81 = arith.constant 5 : index
    %227 = memref.load %arg1[%c4_80, %c5_81] : memref<8x8xf32, #tpu.memory_space<smem>>
    %228 = vector.broadcast %227 : f32 to vector<8x128xf32>
    %229 = arith.mulf %226, %228 : vector<8x128xf32>
    %230 = arith.maximumf %225, %229 : vector<8x128xf32>
    %231 = vector.extract_strided_slice %29 {offsets = [48, 0], sizes = [8, 128], strides = [1, 1]} : vector<64x128xf32> to vector<8x128xf32>
    %c4_82 = arith.constant 4 : index
    %c6_83 = arith.constant 6 : index
    %232 = memref.load %arg1[%c4_82, %c6_83] : memref<8x8xf32, #tpu.memory_space<smem>>
    %233 = vector.broadcast %232 : f32 to vector<8x128xf32>
    %234 = arith.mulf %231, %233 : vector<8x128xf32>
    %235 = arith.maximumf %230, %234 : vector<8x128xf32>
    %236 = vector.extract_strided_slice %29 {offsets = [56, 0], sizes = [8, 128], strides = [1, 1]} : vector<64x128xf32> to vector<8x128xf32>
    %c4_84 = arith.constant 4 : index
    %c7_85 = arith.constant 7 : index
    %237 = memref.load %arg1[%c4_84, %c7_85] : memref<8x8xf32, #tpu.memory_space<smem>>
    %238 = vector.broadcast %237 : f32 to vector<8x128xf32>
    %239 = arith.mulf %236, %238 : vector<8x128xf32>
    %240 = arith.maximumf %235, %239 : vector<8x128xf32>
    %cst_86 = arith.constant dense<0.000000e+00> : vector<128xf32>
    %241 = vector.multi_reduction <add>, %240, %cst_86 [0] : vector<8x128xf32> to vector<128xf32>
    %242 = vector.shape_cast %241 : vector<128xf32> to vector<1x128xf32>
    %cst_87 = arith.constant 1.250000e-01 : f32
    %243 = vector.broadcast %cst_87 : f32 to vector<1x128xf32>
    %244 = arith.mulf %242, %243 : vector<1x128xf32>
    %245 = vector.extract_strided_slice %29 {offsets = [0, 0], sizes = [8, 128], strides = [1, 1]} : vector<64x128xf32> to vector<8x128xf32>
    %c5_88 = arith.constant 5 : index
    %c0_89 = arith.constant 0 : index
    %246 = memref.load %arg1[%c5_88, %c0_89] : memref<8x8xf32, #tpu.memory_space<smem>>
    %247 = vector.broadcast %246 : f32 to vector<8x128xf32>
    %248 = arith.mulf %245, %247 : vector<8x128xf32>
    %249 = vector.extract_strided_slice %29 {offsets = [8, 0], sizes = [8, 128], strides = [1, 1]} : vector<64x128xf32> to vector<8x128xf32>
    %c5_90 = arith.constant 5 : index
    %c1_91 = arith.constant 1 : index
    %250 = memref.load %arg1[%c5_90, %c1_91] : memref<8x8xf32, #tpu.memory_space<smem>>
    %251 = vector.broadcast %250 : f32 to vector<8x128xf32>
    %252 = arith.mulf %249, %251 : vector<8x128xf32>
    %253 = arith.maximumf %248, %252 : vector<8x128xf32>
    %254 = vector.extract_strided_slice %29 {offsets = [16, 0], sizes = [8, 128], strides = [1, 1]} : vector<64x128xf32> to vector<8x128xf32>
    %c5_92 = arith.constant 5 : index
    %c2_93 = arith.constant 2 : index
    %255 = memref.load %arg1[%c5_92, %c2_93] : memref<8x8xf32, #tpu.memory_space<smem>>
    %256 = vector.broadcast %255 : f32 to vector<8x128xf32>
    %257 = arith.mulf %254, %256 : vector<8x128xf32>
    %258 = arith.maximumf %253, %257 : vector<8x128xf32>
    %259 = vector.extract_strided_slice %29 {offsets = [24, 0], sizes = [8, 128], strides = [1, 1]} : vector<64x128xf32> to vector<8x128xf32>
    %c5_94 = arith.constant 5 : index
    %c3_95 = arith.constant 3 : index
    %260 = memref.load %arg1[%c5_94, %c3_95] : memref<8x8xf32, #tpu.memory_space<smem>>
    %261 = vector.broadcast %260 : f32 to vector<8x128xf32>
    %262 = arith.mulf %259, %261 : vector<8x128xf32>
    %263 = arith.maximumf %258, %262 : vector<8x128xf32>
    %264 = vector.extract_strided_slice %29 {offsets = [32, 0], sizes = [8, 128], strides = [1, 1]} : vector<64x128xf32> to vector<8x128xf32>
    %c5_96 = arith.constant 5 : index
    %c4_97 = arith.constant 4 : index
    %265 = memref.load %arg1[%c5_96, %c4_97] : memref<8x8xf32, #tpu.memory_space<smem>>
    %266 = vector.broadcast %265 : f32 to vector<8x128xf32>
    %267 = arith.mulf %264, %266 : vector<8x128xf32>
    %268 = arith.maximumf %263, %267 : vector<8x128xf32>
    %269 = vector.extract_strided_slice %29 {offsets = [40, 0], sizes = [8, 128], strides = [1, 1]} : vector<64x128xf32> to vector<8x128xf32>
    %c5_98 = arith.constant 5 : index
    %c5_99 = arith.constant 5 : index
    %270 = memref.load %arg1[%c5_98, %c5_99] : memref<8x8xf32, #tpu.memory_space<smem>>
    %271 = vector.broadcast %270 : f32 to vector<8x128xf32>
    %272 = arith.mulf %269, %271 : vector<8x128xf32>
    %273 = arith.maximumf %268, %272 : vector<8x128xf32>
    %274 = vector.extract_strided_slice %29 {offsets = [48, 0], sizes = [8, 128], strides = [1, 1]} : vector<64x128xf32> to vector<8x128xf32>
    %c5_100 = arith.constant 5 : index
    %c6_101 = arith.constant 6 : index
    %275 = memref.load %arg1[%c5_100, %c6_101] : memref<8x8xf32, #tpu.memory_space<smem>>
    %276 = vector.broadcast %275 : f32 to vector<8x128xf32>
    %277 = arith.mulf %274, %276 : vector<8x128xf32>
    %278 = arith.maximumf %273, %277 : vector<8x128xf32>
    %279 = vector.extract_strided_slice %29 {offsets = [56, 0], sizes = [8, 128], strides = [1, 1]} : vector<64x128xf32> to vector<8x128xf32>
    %c5_102 = arith.constant 5 : index
    %c7_103 = arith.constant 7 : index
    %280 = memref.load %arg1[%c5_102, %c7_103] : memref<8x8xf32, #tpu.memory_space<smem>>
    %281 = vector.broadcast %280 : f32 to vector<8x128xf32>
    %282 = arith.mulf %279, %281 : vector<8x128xf32>
    %283 = arith.maximumf %278, %282 : vector<8x128xf32>
    %cst_104 = arith.constant dense<0.000000e+00> : vector<128xf32>
    %284 = vector.multi_reduction <add>, %283, %cst_104 [0] : vector<8x128xf32> to vector<128xf32>
    %285 = vector.shape_cast %284 : vector<128xf32> to vector<1x128xf32>
    %cst_105 = arith.constant 1.250000e-01 : f32
    %286 = vector.broadcast %cst_105 : f32 to vector<1x128xf32>
    %287 = arith.mulf %285, %286 : vector<1x128xf32>
    %288 = vector.extract_strided_slice %29 {offsets = [0, 0], sizes = [8, 128], strides = [1, 1]} : vector<64x128xf32> to vector<8x128xf32>
    %c6_106 = arith.constant 6 : index
    %c0_107 = arith.constant 0 : index
    %289 = memref.load %arg1[%c6_106, %c0_107] : memref<8x8xf32, #tpu.memory_space<smem>>
    %290 = vector.broadcast %289 : f32 to vector<8x128xf32>
    %291 = arith.mulf %288, %290 : vector<8x128xf32>
    %292 = vector.extract_strided_slice %29 {offsets = [8, 0], sizes = [8, 128], strides = [1, 1]} : vector<64x128xf32> to vector<8x128xf32>
    %c6_108 = arith.constant 6 : index
    %c1_109 = arith.constant 1 : index
    %293 = memref.load %arg1[%c6_108, %c1_109] : memref<8x8xf32, #tpu.memory_space<smem>>
    %294 = vector.broadcast %293 : f32 to vector<8x128xf32>
    %295 = arith.mulf %292, %294 : vector<8x128xf32>
    %296 = arith.maximumf %291, %295 : vector<8x128xf32>
    %297 = vector.extract_strided_slice %29 {offsets = [16, 0], sizes = [8, 128], strides = [1, 1]} : vector<64x128xf32> to vector<8x128xf32>
    %c6_110 = arith.constant 6 : index
    %c2_111 = arith.constant 2 : index
    %298 = memref.load %arg1[%c6_110, %c2_111] : memref<8x8xf32, #tpu.memory_space<smem>>
    %299 = vector.broadcast %298 : f32 to vector<8x128xf32>
    %300 = arith.mulf %297, %299 : vector<8x128xf32>
    %301 = arith.maximumf %296, %300 : vector<8x128xf32>
    %302 = vector.extract_strided_slice %29 {offsets = [24, 0], sizes = [8, 128], strides = [1, 1]} : vector<64x128xf32> to vector<8x128xf32>
    %c6_112 = arith.constant 6 : index
    %c3_113 = arith.constant 3 : index
    %303 = memref.load %arg1[%c6_112, %c3_113] : memref<8x8xf32, #tpu.memory_space<smem>>
    %304 = vector.broadcast %303 : f32 to vector<8x128xf32>
    %305 = arith.mulf %302, %304 : vector<8x128xf32>
    %306 = arith.maximumf %301, %305 : vector<8x128xf32>
    %307 = vector.extract_strided_slice %29 {offsets = [32, 0], sizes = [8, 128], strides = [1, 1]} : vector<64x128xf32> to vector<8x128xf32>
    %c6_114 = arith.constant 6 : index
    %c4_115 = arith.constant 4 : index
    %308 = memref.load %arg1[%c6_114, %c4_115] : memref<8x8xf32, #tpu.memory_space<smem>>
    %309 = vector.broadcast %308 : f32 to vector<8x128xf32>
    %310 = arith.mulf %307, %309 : vector<8x128xf32>
    %311 = arith.maximumf %306, %310 : vector<8x128xf32>
    %312 = vector.extract_strided_slice %29 {offsets = [40, 0], sizes = [8, 128], strides = [1, 1]} : vector<64x128xf32> to vector<8x128xf32>
    %c6_116 = arith.constant 6 : index
    %c5_117 = arith.constant 5 : index
    %313 = memref.load %arg1[%c6_116, %c5_117] : memref<8x8xf32, #tpu.memory_space<smem>>
    %314 = vector.broadcast %313 : f32 to vector<8x128xf32>
    %315 = arith.mulf %312, %314 : vector<8x128xf32>
    %316 = arith.maximumf %311, %315 : vector<8x128xf32>
    %317 = vector.extract_strided_slice %29 {offsets = [48, 0], sizes = [8, 128], strides = [1, 1]} : vector<64x128xf32> to vector<8x128xf32>
    %c6_118 = arith.constant 6 : index
    %c6_119 = arith.constant 6 : index
    %318 = memref.load %arg1[%c6_118, %c6_119] : memref<8x8xf32, #tpu.memory_space<smem>>
    %319 = vector.broadcast %318 : f32 to vector<8x128xf32>
    %320 = arith.mulf %317, %319 : vector<8x128xf32>
    %321 = arith.maximumf %316, %320 : vector<8x128xf32>
    %322 = vector.extract_strided_slice %29 {offsets = [56, 0], sizes = [8, 128], strides = [1, 1]} : vector<64x128xf32> to vector<8x128xf32>
    %c6_120 = arith.constant 6 : index
    %c7_121 = arith.constant 7 : index
    %323 = memref.load %arg1[%c6_120, %c7_121] : memref<8x8xf32, #tpu.memory_space<smem>>
    %324 = vector.broadcast %323 : f32 to vector<8x128xf32>
    %325 = arith.mulf %322, %324 : vector<8x128xf32>
    %326 = arith.maximumf %321, %325 : vector<8x128xf32>
    %cst_122 = arith.constant dense<0.000000e+00> : vector<128xf32>
    %327 = vector.multi_reduction <add>, %326, %cst_122 [0] : vector<8x128xf32> to vector<128xf32>
    %328 = vector.shape_cast %327 : vector<128xf32> to vector<1x128xf32>
    %cst_123 = arith.constant 1.250000e-01 : f32
    %329 = vector.broadcast %cst_123 : f32 to vector<1x128xf32>
    %330 = arith.mulf %328, %329 : vector<1x128xf32>
    %331 = vector.extract_strided_slice %29 {offsets = [0, 0], sizes = [8, 128], strides = [1, 1]} : vector<64x128xf32> to vector<8x128xf32>
    %c7_124 = arith.constant 7 : index
    %c0_125 = arith.constant 0 : index
    %332 = memref.load %arg1[%c7_124, %c0_125] : memref<8x8xf32, #tpu.memory_space<smem>>
    %333 = vector.broadcast %332 : f32 to vector<8x128xf32>
    %334 = arith.mulf %331, %333 : vector<8x128xf32>
    %335 = vector.extract_strided_slice %29 {offsets = [8, 0], sizes = [8, 128], strides = [1, 1]} : vector<64x128xf32> to vector<8x128xf32>
    %c7_126 = arith.constant 7 : index
    %c1_127 = arith.constant 1 : index
    %336 = memref.load %arg1[%c7_126, %c1_127] : memref<8x8xf32, #tpu.memory_space<smem>>
    %337 = vector.broadcast %336 : f32 to vector<8x128xf32>
    %338 = arith.mulf %335, %337 : vector<8x128xf32>
    %339 = arith.maximumf %334, %338 : vector<8x128xf32>
    %340 = vector.extract_strided_slice %29 {offsets = [16, 0], sizes = [8, 128], strides = [1, 1]} : vector<64x128xf32> to vector<8x128xf32>
    %c7_128 = arith.constant 7 : index
    %c2_129 = arith.constant 2 : index
    %341 = memref.load %arg1[%c7_128, %c2_129] : memref<8x8xf32, #tpu.memory_space<smem>>
    %342 = vector.broadcast %341 : f32 to vector<8x128xf32>
    %343 = arith.mulf %340, %342 : vector<8x128xf32>
    %344 = arith.maximumf %339, %343 : vector<8x128xf32>
    %345 = vector.extract_strided_slice %29 {offsets = [24, 0], sizes = [8, 128], strides = [1, 1]} : vector<64x128xf32> to vector<8x128xf32>
    %c7_130 = arith.constant 7 : index
    %c3_131 = arith.constant 3 : index
    %346 = memref.load %arg1[%c7_130, %c3_131] : memref<8x8xf32, #tpu.memory_space<smem>>
    %347 = vector.broadcast %346 : f32 to vector<8x128xf32>
    %348 = arith.mulf %345, %347 : vector<8x128xf32>
    %349 = arith.maximumf %344, %348 : vector<8x128xf32>
    %350 = vector.extract_strided_slice %29 {offsets = [32, 0], sizes = [8, 128], strides = [1, 1]} : vector<64x128xf32> to vector<8x128xf32>
    %c7_132 = arith.constant 7 : index
    %c4_133 = arith.constant 4 : index
    %351 = memref.load %arg1[%c7_132, %c4_133] : memref<8x8xf32, #tpu.memory_space<smem>>
    %352 = vector.broadcast %351 : f32 to vector<8x128xf32>
    %353 = arith.mulf %350, %352 : vector<8x128xf32>
    %354 = arith.maximumf %349, %353 : vector<8x128xf32>
    %355 = vector.extract_strided_slice %29 {offsets = [40, 0], sizes = [8, 128], strides = [1, 1]} : vector<64x128xf32> to vector<8x128xf32>
    %c7_134 = arith.constant 7 : index
    %c5_135 = arith.constant 5 : index
    %356 = memref.load %arg1[%c7_134, %c5_135] : memref<8x8xf32, #tpu.memory_space<smem>>
    %357 = vector.broadcast %356 : f32 to vector<8x128xf32>
    %358 = arith.mulf %355, %357 : vector<8x128xf32>
    %359 = arith.maximumf %354, %358 : vector<8x128xf32>
    %360 = vector.extract_strided_slice %29 {offsets = [48, 0], sizes = [8, 128], strides = [1, 1]} : vector<64x128xf32> to vector<8x128xf32>
    %c7_136 = arith.constant 7 : index
    %c6_137 = arith.constant 6 : index
    %361 = memref.load %arg1[%c7_136, %c6_137] : memref<8x8xf32, #tpu.memory_space<smem>>
    %362 = vector.broadcast %361 : f32 to vector<8x128xf32>
    %363 = arith.mulf %360, %362 : vector<8x128xf32>
    %364 = arith.maximumf %359, %363 : vector<8x128xf32>
    %365 = vector.extract_strided_slice %29 {offsets = [56, 0], sizes = [8, 128], strides = [1, 1]} : vector<64x128xf32> to vector<8x128xf32>
    %c7_138 = arith.constant 7 : index
    %c7_139 = arith.constant 7 : index
    %366 = memref.load %arg1[%c7_138, %c7_139] : memref<8x8xf32, #tpu.memory_space<smem>>
    %367 = vector.broadcast %366 : f32 to vector<8x128xf32>
    %368 = arith.mulf %365, %367 : vector<8x128xf32>
    %369 = arith.maximumf %364, %368 : vector<8x128xf32>
    %cst_140 = arith.constant dense<0.000000e+00> : vector<128xf32>
    %370 = vector.multi_reduction <add>, %369, %cst_140 [0] : vector<8x128xf32> to vector<128xf32>
    %371 = vector.shape_cast %370 : vector<128xf32> to vector<1x128xf32>
    %cst_141 = arith.constant 1.250000e-01 : f32
    %372 = vector.broadcast %cst_141 : f32 to vector<1x128xf32>
    %373 = arith.mulf %371, %372 : vector<1x128xf32>
    %374 = tpu.concatenate %72, %115, %158, %201, %244, %287, %330, %373 in 0 : vector<1x128xf32>, vector<1x128xf32>, vector<1x128xf32>, vector<1x128xf32>, vector<1x128xf32>, vector<1x128xf32>, vector<1x128xf32>, vector<1x128xf32> -> vector<8x128xf32>
    %c0_142 = arith.constant 0 : index
    %c0_143 = arith.constant 0 : index
    %c0_144 = arith.constant 0 : index
    %375 = vector.load %arg4[%c0_142, %c0_143, %c0_144] : memref<3x256x256xf32, #tpu.memory_space<vmem>>, vector<1x256x256xf32>
    %376 = vector.shape_cast %375 : vector<1x256x256xf32> to vector<256x256xf32>
    %377 = vector.extract_strided_slice %376 {offsets = [0, 0], sizes = [128, 256], strides = [1, 1]} : vector<256x256xf32> to vector<128x256xf32>
    %cst_145 = arith.constant dense<0.000000e+00> : vector<8x256xf32>
    %378 = tpu.matmul %374, %377, %cst_145 {dimension_numbers = #tpu.dot_dimension_numbers<[1], [0], [0], [1], [0, 0, 1, 1], [], []>} : vector<8x128xf32>, vector<128x256xf32>, vector<8x256xf32> -> vector<8x256xf32>
    %c1_146 = arith.constant 1 : index
    %c0_147 = arith.constant 0 : index
    %379 = vector.load %arg5[%c1_146, %c0_147] : memref<4x256xf32, #tpu.memory_space<vmem>>, vector<1x256xf32>
    %380 = vector.broadcast %379 : vector<1x256xf32> to vector<8x256xf32>
    %381 = arith.addf %378, %380 : vector<8x256xf32>
    %cst_148 = arith.constant 0.000000e+00 : f32
    %382 = vector.broadcast %cst_148 : f32 to vector<8x256xf32>
    %383 = arith.maximumf %381, %382 : vector<8x256xf32>
    %cst_149 = arith.constant 6.000000e+00 : f32
    %384 = vector.broadcast %cst_149 : f32 to vector<8x256xf32>
    %385 = arith.minimumf %383, %384 : vector<8x256xf32>
    %c1_150 = arith.constant 1 : index
    %c0_151 = arith.constant 0 : index
    %c0_152 = arith.constant 0 : index
    %386 = vector.load %arg4[%c1_150, %c0_151, %c0_152] : memref<3x256x256xf32, #tpu.memory_space<vmem>>, vector<1x256x256xf32>
    %387 = vector.shape_cast %386 : vector<1x256x256xf32> to vector<256x256xf32>
    %cst_153 = arith.constant dense<0.000000e+00> : vector<8x256xf32>
    %388 = tpu.matmul %385, %387, %cst_153 {dimension_numbers = #tpu.dot_dimension_numbers<[1], [0], [0], [1], [0, 0, 1, 1], [], []>} : vector<8x256xf32>, vector<256x256xf32>, vector<8x256xf32> -> vector<8x256xf32>
    %c2_154 = arith.constant 2 : index
    %c0_155 = arith.constant 0 : index
    %389 = vector.load %arg5[%c2_154, %c0_155] : memref<4x256xf32, #tpu.memory_space<vmem>>, vector<1x256xf32>
    %390 = vector.broadcast %389 : vector<1x256xf32> to vector<8x256xf32>
    %391 = arith.addf %388, %390 : vector<8x256xf32>
    %cst_156 = arith.constant 0.000000e+00 : f32
    %392 = vector.broadcast %cst_156 : f32 to vector<8x256xf32>
    %393 = arith.maximumf %391, %392 : vector<8x256xf32>
    %cst_157 = arith.constant 6.000000e+00 : f32
    %394 = vector.broadcast %cst_157 : f32 to vector<8x256xf32>
    %395 = arith.minimumf %393, %394 : vector<8x256xf32>
    %c2_158 = arith.constant 2 : index
    %c0_159 = arith.constant 0 : index
    %c0_160 = arith.constant 0 : index
    %396 = vector.load %arg4[%c2_158, %c0_159, %c0_160] : memref<3x256x256xf32, #tpu.memory_space<vmem>>, vector<1x256x256xf32>
    %397 = vector.shape_cast %396 : vector<1x256x256xf32> to vector<256x256xf32>
    %cst_161 = arith.constant dense<0.000000e+00> : vector<8x256xf32>
    %398 = tpu.matmul %395, %397, %cst_161 {dimension_numbers = #tpu.dot_dimension_numbers<[1], [0], [0], [1], [0, 0, 1, 1], [], []>} : vector<8x256xf32>, vector<256x256xf32>, vector<8x256xf32> -> vector<8x256xf32>
    %c3_162 = arith.constant 3 : index
    %c0_163 = arith.constant 0 : index
    %399 = vector.load %arg5[%c3_162, %c0_163] : memref<4x256xf32, #tpu.memory_space<vmem>>, vector<1x256xf32>
    %400 = vector.broadcast %399 : vector<1x256xf32> to vector<8x256xf32>
    %401 = arith.addf %398, %400 : vector<8x256xf32>
    %cst_164 = arith.constant 0.000000e+00 : f32
    %402 = vector.broadcast %cst_164 : f32 to vector<8x256xf32>
    %403 = arith.maximumf %401, %402 : vector<8x256xf32>
    %cst_165 = arith.constant 6.000000e+00 : f32
    %404 = vector.broadcast %cst_165 : f32 to vector<8x256xf32>
    %405 = arith.minimumf %403, %404 : vector<8x256xf32>
    %406 = vector.extract_strided_slice %405 {offsets = [0, 0], sizes = [8, 128], strides = [1, 1]} : vector<8x256xf32> to vector<8x128xf32>
    %407 = vector.extract_strided_slice %405 {offsets = [0, 128], sizes = [8, 128], strides = [1, 1]} : vector<8x256xf32> to vector<8x128xf32>
    %c0_166 = arith.constant 0 : index
    %c0_167 = arith.constant 0 : index
    %408 = vector.load %arg2[%c0_166, %c0_167] : memref<8x128xf32, #tpu.memory_space<vmem>>, vector<8x128xf32>
    %cst_168 = arith.constant 5.000000e-01 : f32
    %409 = vector.broadcast %cst_168 : f32 to vector<8x128xf32>
    %410 = arith.mulf %409, %407 : vector<8x128xf32>
    %411 = math.exp %410 : vector<8x128xf32>
    %412 = arith.mulf %408, %411 : vector<8x128xf32>
    %413 = arith.addf %412, %406 : vector<8x128xf32>
    %c0_169 = arith.constant 0 : index
    %c0_170 = arith.constant 0 : index
    %c0_171 = arith.constant 0 : index
    %414 = vector.load %arg6[%c0_169, %c0_170, %c0_171] : memref<3x8x128xf32, #tpu.memory_space<vmem>>, vector<1x8x128xf32>
    %415 = vector.shape_cast %414 : vector<1x8x128xf32> to vector<8x128xf32>
    %416 = vector.shape_cast %413 : vector<8x128xf32> to vector<1x8x128xf32>
    tpu.vector_store %arg6[%c0_169, %c0_170, %c0_171], %416 {strides = array<i32>} : memref<3x8x128xf32, #tpu.memory_space<vmem>>, vector<1x8x128xf32>,
    %c1_172 = arith.constant 1 : index
    %c0_173 = arith.constant 0 : index
    %c0_174 = arith.constant 0 : index
    %417 = vector.load %arg6[%c1_172, %c0_173, %c0_174] : memref<3x8x128xf32, #tpu.memory_space<vmem>>, vector<1x8x128xf32>
    %418 = vector.shape_cast %417 : vector<1x8x128xf32> to vector<8x128xf32>
    %419 = vector.shape_cast %406 : vector<8x128xf32> to vector<1x8x128xf32>
    tpu.vector_store %arg6[%c1_172, %c0_173, %c0_174], %419 {strides = array<i32>} : memref<3x8x128xf32, #tpu.memory_space<vmem>>, vector<1x8x128xf32>,
    %c2_175 = arith.constant 2 : index
    %c0_176 = arith.constant 0 : index
    %c0_177 = arith.constant 0 : index
    %420 = vector.load %arg6[%c2_175, %c0_176, %c0_177] : memref<3x8x128xf32, #tpu.memory_space<vmem>>, vector<1x8x128xf32>
    %421 = vector.shape_cast %420 : vector<1x8x128xf32> to vector<8x128xf32>
    %422 = vector.shape_cast %407 : vector<8x128xf32> to vector<1x8x128xf32>
    tpu.vector_store %arg6[%c2_175, %c0_176, %c0_177], %422 {strides = array<i32>} : memref<3x8x128xf32, #tpu.memory_space<vmem>>, vector<1x8x128xf32>,
    return
  }
}

</mosaic_0001>

<llo_original>
// kernel: tpu_custom_call.1
$region0: #{tpu_custom_call.1}
  #allocation0 [shape = 'u32[]', space=smem, size = 0x4, offset = 0x4, fixed_abs, tag = 'smem constant byte address 0x4 - core index']
  #allocation1 [shape = 'u32[144,128]{1,0:T(1,128)}', space=vmem, size = 0x12000, scoped, tag = 'internal scratch']
  %s0 = inlined_call_operand.vmem [shape: f32[64,4], index: 0, kind: input, shape index: {}]
  %s1 = inlined_call_operand.vmem [shape: f32[8,8], index: 1, kind: input, shape index: {}]
  %s2 = inlined_call_operand.vmem [shape: f32[8,128], index: 2, kind: input, shape index: {}]
  %s3 = inlined_call_operand.vmem [shape: f32[4,128], index: 3, kind: input, shape index: {}]
  %s4 = inlined_call_operand.hbm [shape: f32[3,256,256], index: 4, kind: input, shape index: {}]
  %s5 = inlined_call_operand.vmem [shape: f32[4,256], index: 5, kind: input, shape index: {}]
  %s6 = inlined_call_operand.hbm [shape: f32[3,8,128], index: 6, kind: output, shape index: {}]
  %s7 = sld [smem:[#allocation0]]
  $region42: #{tpu_custom_call.1} parent=0
    _
  %s9 = ssub.s32 1, %s7
  %s10 = scalar_select 0, %s9, %s7
  $region1: #{tpu_custom_call.1} parent=0
    #allocation2 [shape = 'u8[4096]{0}', space=smem, size = 0x1000, scoped, tag = 'input window, operand 1, single buffered']
    #allocation3 [shape = 's32[1]{0}', space=sflag, size = 0x4, scoped, tag = 'scoped memory for tpu_custom_call.1']
    #allocation4 [shape = 's32[1]{0}', space=sflag, size = 0x4, scoped, tag = 'scoped memory for tpu_custom_call.1']
    #allocation5 [shape = 's32[1]{0}', space=sflag, size = 0x4, scoped, tag = 'scoped memory for tpu_custom_call.1']
    #allocation6 [shape = 'u8[786432]{0}', space=vmem, size = 0xc0000, scoped, tag = 'input window, operand 4, single buffered']
    #allocation7 [shape = 'u8[12288]{0}', space=vmem, size = 0x3000, scoped, tag = 'output window, operand 0, single buffered']
    %11 = vsyncpa [#allocation5], 0
    %12 = vsyncpa [#allocation3], 0
    %13 = vsyncpa [#allocation4], 0
    // Predicated region
    $region2: #{tpu_custom_call.1} parent=1 // pred_check
      _
    $region3: #{tpu_custom_call.1} parent=1 // pred_check_branch
      %15 = sbr.rel (0) target = $region5
    $region4: #{tpu_custom_call.1} parent=1 // pred_region
      _
    $region5: #{tpu_custom_call.1} parent=1 // pred_fallthru
      _
    // Predicated region
    $region6: #{tpu_custom_call.1} parent=1 // pred_check
      _
    $region7: #{tpu_custom_call.1} parent=1 // pred_check_branch
      %17 = sbr.rel (0) target = $region9
    $region8: #{tpu_custom_call.1} parent=1 // pred_region
      %s19 = ssub.s32 128, 128
      %20 = vsyncadd [#allocation5], %s19
      %s22 = sshll.u32 %s1, 4
      %s23 = int_to_ptr.vmem [resolvable:$true] %s22
      %25 = dma.vmem_to_smem %s23, 128, [#allocation2], [#allocation5]
    $region9: #{tpu_custom_call.1} parent=1 // pred_fallthru
      _
    // Predicated region
    $region10: #{tpu_custom_call.1} parent=1 // pred_check
      _
    $region11: #{tpu_custom_call.1} parent=1 // pred_check_branch
      %27 = sbr.rel (0) target = $region13
    $region12: #{tpu_custom_call.1} parent=1 // pred_region
      _
    $region13: #{tpu_custom_call.1} parent=1 // pred_fallthru
      _
    // Predicated region
    $region14: #{tpu_custom_call.1} parent=1 // pred_check
      _
    $region15: #{tpu_custom_call.1} parent=1 // pred_check_branch
      %29 = sbr.rel (0) target = $region17
    $region16: #{tpu_custom_call.1} parent=1 // pred_region
      _
    $region17: #{tpu_custom_call.1} parent=1 // pred_fallthru
      _
    // Predicated region
    $region18: #{tpu_custom_call.1} parent=1 // pred_check
      _
    $region19: #{tpu_custom_call.1} parent=1 // pred_check_branch
      %31 = sbr.rel (0) target = $region21
    $region20: #{tpu_custom_call.1} parent=1 // pred_region
      %s33 = ssub.s32 24576, 24576
      %34 = vsyncadd [#allocation3], %s33
      %s35 = sshll.u32 [#allocation6], 4
      %s36 = int_to_ptr.vmem [resolvable:$true] %s35
      %41 = dma.hbm_to_vmem [thread:$0]  %s4, 24576, %s36, [#allocation3], 256, 256, 16
    $region21: #{tpu_custom_call.1} parent=1 // pred_fallthru
      _
    // Predicated region
    $region22: #{tpu_custom_call.1} parent=1 // pred_check
      _
    $region23: #{tpu_custom_call.1} parent=1 // pred_check_branch
      %43 = sbr.rel (0) target = $region25
    $region24: #{tpu_custom_call.1} parent=1 // pred_region
      _
    $region25: #{tpu_custom_call.1} parent=1 // pred_fallthru
      _
    // Predicated region
    $region26: #{tpu_custom_call.1} parent=1 // pred_check
      _
    $region27: #{tpu_custom_call.1} parent=1 // pred_check_branch
      %45 = sbr.rel (0) target = $region29
    $region28: #{tpu_custom_call.1} parent=1 // pred_region
      %46 = dma.done [#allocation5], 128
    $region29: #{tpu_custom_call.1} parent=1 // pred_fallthru
      _
    // Predicated region
    $region30: #{tpu_custom_call.1} parent=1 // pred_check
      _
    $region31: #{tpu_custom_call.1} parent=1 // pred_check_branch
      %48 = sbr.rel (0) target = $region33
    $region32: #{tpu_custom_call.1} parent=1 // pred_region
      %49 = dma.done [#allocation3], 24576
    $region33: #{tpu_custom_call.1} parent=1 // pred_fallthru
      _
    %50 = sfence
    %v51 = vld [vmem:[%s0] sm:$0xff]
    %v52 = vld [vmem:[%s0 + $0x8] sm:$0xff]
    %v53 = vld [vmem:[%s0 + $0x10] sm:$0xff]
    %v54 = vld [vmem:[%s0 + $0x18] sm:$0xff]
    %v55 = vld [vmem:[%s0 + $0x20] sm:$0xff]
    %v56 = vld [vmem:[%s0 + $0x28] sm:$0xff]
    %v57 = vld [vmem:[%s0 + $0x30] sm:$0xff]
    %v58 = vld [vmem:[%s0 + $0x38] sm:$0xff]
    %v59 = vld [vmem:[%s3] sm:$0xf]
    %61 = vset.pattern.permute.xlu0 0
    %62 = vperm.xlu0 %61, %v51
    %v63 = vpop.permute.xlu0 %62
    %66 = vset.pattern.permute.xlu0 0
    %67 = vperm.xlu0 %66, %v52
    %v68 = vpop.permute.xlu0 %67
    %71 = vset.pattern.permute.xlu0 0
    %72 = vperm.xlu0 %71, %v53
    %v73 = vpop.permute.xlu0 %72
    %76 = vset.pattern.permute.xlu0 0
    %77 = vperm.xlu0 %76, %v54
    %v78 = vpop.permute.xlu0 %77
    %81 = vset.pattern.permute.xlu0 0
    %82 = vperm.xlu0 %81, %v55
    %v83 = vpop.permute.xlu0 %82
    %86 = vset.pattern.permute.xlu0 0
    %87 = vperm.xlu0 %86, %v56
    %v88 = vpop.permute.xlu0 %87
    %91 = vset.pattern.permute.xlu0 0
    %92 = vperm.xlu0 %91, %v57
    %v93 = vpop.permute.xlu0 %92
    %96 = vset.pattern.permute.xlu0 0
    %97 = vperm.xlu0 %96, %v58
    %v98 = vpop.permute.xlu0 %97
    %v100 = vlaneseq
    %v101 = vshrl.u32 %v100, 7
    %v102 = vsub.s32 0, %v101
    %v103 = vrot.slane %v59, %v102
    %v104 = vmul.f32 %v63, %v103
    %v105 = vmul.f32 %v68, %v103
    %v106 = vmul.f32 %v73, %v103
    %v107 = vmul.f32 %v78, %v103
    %v108 = vmul.f32 %v83, %v103
    %v109 = vmul.f32 %v88, %v103
    %v110 = vmul.f32 %v93, %v103
    %v111 = vmul.f32 %v98, %v103
    %112 = vset.pattern.permute.xlu0 1
    %113 = vperm.xlu0 %112, %v51
    %v114 = vpop.permute.xlu0 %113
    %116 = vset.pattern.permute.xlu0 1
    %117 = vperm.xlu0 %116, %v52
    %v118 = vpop.permute.xlu0 %117
    %120 = vset.pattern.permute.xlu0 1
    %121 = vperm.xlu0 %120, %v53
    %v122 = vpop.permute.xlu0 %121
    %124 = vset.pattern.permute.xlu0 1
    %125 = vperm.xlu0 %124, %v54
    %v126 = vpop.permute.xlu0 %125
    %128 = vset.pattern.permute.xlu0 1
    %129 = vperm.xlu0 %128, %v55
    %v130 = vpop.permute.xlu0 %129
    %132 = vset.pattern.permute.xlu0 1
    %133 = vperm.xlu0 %132, %v56
    %v134 = vpop.permute.xlu0 %133
    %136 = vset.pattern.permute.xlu0 1
    %137 = vperm.xlu0 %136, %v57
    %v138 = vpop.permute.xlu0 %137
    %140 = vset.pattern.permute.xlu0 1
    %141 = vperm.xlu0 %140, %v58
    %v142 = vpop.permute.xlu0 %141
    %v144 = vlaneseq
    %v145 = vshrl.u32 %v144, 7
    %v146 = vsub.s32 1, %v145
    %v147 = vrot.slane %v59, %v146
    %v148 = vmul.f32 %v114, %v147
    %v149 = vmul.f32 %v118, %v147
    %v150 = vmul.f32 %v122, %v147
    %v151 = vmul.f32 %v126, %v147
    %v152 = vmul.f32 %v130, %v147
    %v153 = vmul.f32 %v134, %v147
    %v154 = vmul.f32 %v138, %v147
    %v155 = vmul.f32 %v142, %v147
    %v156 = vadd.f32 %v104, %v148
    %v157 = vadd.f32 %v105, %v149
    %v158 = vadd.f32 %v106, %v150
    %v159 = vadd.f32 %v107, %v151
    %v160 = vadd.f32 %v108, %v152
    %v161 = vadd.f32 %v109, %v153
    %v162 = vadd.f32 %v110, %v154
    %v163 = vadd.f32 %v111, %v155
    %164 = vset.pattern.permute.xlu0 2
    %165 = vperm.xlu0 %164, %v51
    %v166 = vpop.permute.xlu0 %165
    %168 = vset.pattern.permute.xlu0 2
    %169 = vperm.xlu0 %168, %v52
    %v170 = vpop.permute.xlu0 %169
    %172 = vset.pattern.permute.xlu0 2
    %173 = vperm.xlu0 %172, %v53
    %v174 = vpop.permute.xlu0 %173
    %176 = vset.pattern.permute.xlu0 2
    %177 = vperm.xlu0 %176, %v54
    %v178 = vpop.permute.xlu0 %177
    %180 = vset.pattern.permute.xlu0 2
    %181 = vperm.xlu0 %180, %v55
    %v182 = vpop.permute.xlu0 %181
    %184 = vset.pattern.permute.xlu0 2
    %185 = vperm.xlu0 %184, %v56
    %v186 = vpop.permute.xlu0 %185
    %188 = vset.pattern.permute.xlu0 2
    %189 = vperm.xlu0 %188, %v57
    %v190 = vpop.permute.xlu0 %189
    %192 = vset.pattern.permute.xlu0 2
    %193 = vperm.xlu0 %192, %v58
    %v194 = vpop.permute.xlu0 %193
    %v196 = vlaneseq
    %v197 = vshrl.u32 %v196, 7
    %v198 = vsub.s32 2, %v197
    %v199 = vrot.slane %v59, %v198
    %v200 = vmul.f32 %v166, %v199
    %v201 = vmul.f32 %v170, %v199
    %v202 = vmul.f32 %v174, %v199
    %v203 = vmul.f32 %v178, %v199
    %v204 = vmul.f32 %v182, %v199
    %v205 = vmul.f32 %v186, %v199
    %v206 = vmul.f32 %v190, %v199
    %v207 = vmul.f32 %v194, %v199
    %v208 = vadd.f32 %v156, %v200
    %v209 = vadd.f32 %v157, %v201
    %v210 = vadd.f32 %v158, %v202
    %v211 = vadd.f32 %v159, %v203
    %v212 = vadd.f32 %v160, %v204
    %v213 = vadd.f32 %v161, %v205
    %v214 = vadd.f32 %v162, %v206
    %v215 = vadd.f32 %v163, %v207
    %216 = vset.pattern.permute.xlu0 3
    %217 = vperm.xlu0 %216, %v51
    %v218 = vpop.permute.xlu0 %217
    %220 = vset.pattern.permute.xlu0 3
    %221 = vperm.xlu0 %220, %v52
    %v222 = vpop.permute.xlu0 %221
    %224 = vset.pattern.permute.xlu0 3
    %225 = vperm.xlu0 %224, %v53
    %v226 = vpop.permute.xlu0 %225
    %228 = vset.pattern.permute.xlu0 3
    %229 = vperm.xlu0 %228, %v54
    %v230 = vpop.permute.xlu0 %229
    %232 = vset.pattern.permute.xlu0 3
    %233 = vperm.xlu0 %232, %v55
    %v234 = vpop.permute.xlu0 %233
    %236 = vset.pattern.permute.xlu0 3
    %237 = vperm.xlu0 %236, %v56
    %v238 = vpop.permute.xlu0 %237
    %240 = vset.pattern.permute.xlu0 3
    %241 = vperm.xlu0 %240, %v57
    %v242 = vpop.permute.xlu0 %241
    %244 = vset.pattern.permute.xlu0 3
    %245 = vperm.xlu0 %244, %v58
    %v246 = vpop.permute.xlu0 %245
    %v248 = vlaneseq
    %v249 = vshrl.u32 %v248, 7
    %v250 = vsub.s32 3, %v249
    %v251 = vrot.slane %v59, %v250
    %v252 = vmul.f32 %v218, %v251
    %v253 = vmul.f32 %v222, %v251
    %v254 = vmul.f32 %v226, %v251
    %v255 = vmul.f32 %v230, %v251
    %v256 = vmul.f32 %v234, %v251
    %v257 = vmul.f32 %v238, %v251
    %v258 = vmul.f32 %v242, %v251
    %v259 = vmul.f32 %v246, %v251
    %v260 = vadd.f32 %v208, %v252
    %v261 = vadd.f32 %v209, %v253
    %v262 = vadd.f32 %v210, %v254
    %v263 = vadd.f32 %v211, %v255
    %v264 = vadd.f32 %v212, %v256
    %v265 = vadd.f32 %v213, %v257
    %v266 = vadd.f32 %v214, %v258
    %v267 = vadd.f32 %v215, %v259
    %v268 = vld [vmem:[%s5] sm:$0x1]
    %v269 = vlaneseq
    %v270 = vshrl.u32 %v269, 7
    %v271 = vsub.s32 0, %v270
    %v272 = vrot.slane %v268, %v271
    %v273 = vadd.f32 %v260, %v272
    %v274 = vadd.f32 %v261, %v272
    %v275 = vadd.f32 %v262, %v272
    %v276 = vadd.f32 %v263, %v272
    %v277 = vadd.f32 %v264, %v272
    %v278 = vadd.f32 %v265, %v272
    %v279 = vadd.f32 %v266, %v272
    %v280 = vadd.f32 %v267, %v272
    %v281 = vmax.f32 %v273, 0.0
    %v282 = vmax.f32 %v274, 0.0
    %v283 = vmax.f32 %v275, 0.0
    %v284 = vmax.f32 %v276, 0.0
    %v285 = vmax.f32 %v277, 0.0
    %v286 = vmax.f32 %v278, 0.0
    %v287 = vmax.f32 %v279, 0.0
    %v288 = vmax.f32 %v280, 0.0
    %s289 = sld [smem:[#allocation2]]
    %v290 = vstv %s289
    %v291 = vmul.f32 %v281, %v290
    %s292 = sld [smem:[#allocation2 + $0x1]]
    %v293 = vstv %s292
    %v294 = vmul.f32 %v282, %v293
    %v295 = vmax.f32 %v291, %v294
    %s296 = sld [smem:[#allocation2 + $0x2]]
    %v297 = vstv %s296
    %v298 = vmul.f32 %v283, %v297
    %v299 = vmax.f32 %v295, %v298
    %s300 = sld [smem:[#allocation2 + $0x3]]
    %v301 = vstv %s300
    %v302 = vmul.f32 %v284, %v301
    %v303 = vmax.f32 %v299, %v302
    %s304 = sld [smem:[#allocation2 + $0x4]]
    %v305 = vstv %s304
    %v306 = vmul.f32 %v285, %v305
    %v307 = vmax.f32 %v303, %v306
    %s308 = sld [smem:[#allocation2 + $0x5]]
    %v309 = vstv %s308
    %v310 = vmul.f32 %v286, %v309
    %v311 = vmax.f32 %v307, %v310
    %s312 = sld [smem:[#allocation2 + $0x6]]
    %v313 = vstv %s312
    %v314 = vmul.f32 %v287, %v313
    %v315 = vmax.f32 %v311, %v314
    %s316 = sld [smem:[#allocation2 + $0x7]]
    %v317 = vstv %s316
    %v318 = vmul.f32 %v288, %v317
    %v319 = vmax.f32 %v315, %v318
    %v320 = vrot.slane %v319, 4
    %v321 = vadd.f32 %v319, %v320
    %v322 = vrot.slane %v321, 2
    %v323 = vadd.f32 %v321, %v322
    %v324 = vrot.slane %v323, 1
    %v325 = vadd.f32 %v323, %v324
    %v326 = vmul.f32 %v325, 0.125
    %s327 = sld [smem:[#allocation2 + $0x80]]
    %v328 = vstv %s327
    %v329 = vmul.f32 %v281, %v328
    %s330 = sld [smem:[#allocation2 + $0x81]]
    %v331 = vstv %s330
    %v332 = vmul.f32 %v282, %v331
    %v333 = vmax.f32 %v329, %v332
    %s334 = sld [smem:[#allocation2 + $0x82]]
    %v335 = vstv %s334
    %v336 = vmul.f32 %v283, %v335
    %v337 = vmax.f32 %v333, %v336
    %s338 = sld [smem:[#allocation2 + $0x83]]
    %v339 = vstv %s338
    %v340 = vmul.f32 %v284, %v339
    %v341 = vmax.f32 %v337, %v340
    %s342 = sld [smem:[#allocation2 + $0x84]]
    %v343 = vstv %s342
    %v344 = vmul.f32 %v285, %v343
    %v345 = vmax.f32 %v341, %v344
    %s346 = sld [smem:[#allocation2 + $0x85]]
    %v347 = vstv %s346
    %v348 = vmul.f32 %v286, %v347
    %v349 = vmax.f32 %v345, %v348
    %s350 = sld [smem:[#allocation2 + $0x86]]
    %v351 = vstv %s350
    %v352 = vmul.f32 %v287, %v351
    %v353 = vmax.f32 %v349, %v352
    %s354 = sld [smem:[#allocation2 + $0x87]]
    %v355 = vstv %s354
    %v356 = vmul.f32 %v288, %v355
    %v357 = vmax.f32 %v353, %v356
    %v358 = vrot.slane %v357, 4
    %v359 = vadd.f32 %v357, %v358
    %v360 = vrot.slane %v359, 2
    %v361 = vadd.f32 %v359, %v360
    %v362 = vrot.slane %v361, 1
    %v363 = vadd.f32 %v361, %v362
    %v364 = vmul.f32 %v363, 0.125
    %s365 = sld [smem:[#allocation2 + $0x100]]
    %v366 = vstv %s365
    %v367 = vmul.f32 %v281, %v366
    %s368 = sld [smem:[#allocation2 + $0x101]]
    %v369 = vstv %s368
    %v370 = vmul.f32 %v282, %v369
    %v371 = vmax.f32 %v367, %v370
    %s372 = sld [smem:[#allocation2 + $0x102]]
    %v373 = vstv %s372
    %v374 = vmul.f32 %v283, %v373
    %v375 = vmax.f32 %v371, %v374
    %s376 = sld [smem:[#allocation2 + $0x103]]
    %v377 = vstv %s376
    %v378 = vmul.f32 %v284, %v377
    %v379 = vmax.f32 %v375, %v378
    %s380 = sld [smem:[#allocation2 + $0x104]]
    %v381 = vstv %s380
    %v382 = vmul.f32 %v285, %v381
    %v383 = vmax.f32 %v379, %v382
    %s384 = sld [smem:[#allocation2 + $0x105]]
    %v385 = vstv %s384
    %v386 = vmul.f32 %v286, %v385
    %v387 = vmax.f32 %v383, %v386
    %s388 = sld [smem:[#allocation2 + $0x106]]
    %v389 = vstv %s388
    %v390 = vmul.f32 %v287, %v389
    %v391 = vmax.f32 %v387, %v390
    %s392 = sld [smem:[#allocation2 + $0x107]]
    %v393 = vstv %s392
    %v394 = vmul.f32 %v288, %v393
    %v395 = vmax.f32 %v391, %v394
    %v396 = vrot.slane %v395, 4
    %v397 = vadd.f32 %v395, %v396
    %v398 = vrot.slane %v397, 2
    %v399 = vadd.f32 %v397, %v398
    %v400 = vrot.slane %v399, 1
    %v401 = vadd.f32 %v399, %v400
    %v402 = vmul.f32 %v401, 0.125
    %s403 = sld [smem:[#allocation2 + $0x180]]
    %v404 = vstv %s403
    %v405 = vmul.f32 %v281, %v404
    %s406 = sld [smem:[#allocation2 + $0x181]]
    %v407 = vstv %s406
    %v408 = vmul.f32 %v282, %v407
    %v409 = vmax.f32 %v405, %v408
    %s410 = sld [smem:[#allocation2 + $0x182]]
    %v411 = vstv %s410
    %v412 = vmul.f32 %v283, %v411
    %v413 = vmax.f32 %v409, %v412
    %s414 = sld [smem:[#allocation2 + $0x183]]
    %v415 = vstv %s414
    %v416 = vmul.f32 %v284, %v415
    %v417 = vmax.f32 %v413, %v416
    %s418 = sld [smem:[#allocation2 + $0x184]]
    %v419 = vstv %s418
    %v420 = vmul.f32 %v285, %v419
    %v421 = vmax.f32 %v417, %v420
    %s422 = sld [smem:[#allocation2 + $0x185]]
    %v423 = vstv %s422
    %v424 = vmul.f32 %v286, %v423
    %v425 = vmax.f32 %v421, %v424
    %s426 = sld [smem:[#allocation2 + $0x186]]
    %v427 = vstv %s426
    %v428 = vmul.f32 %v287, %v427
    %v429 = vmax.f32 %v425, %v428
    %s430 = sld [smem:[#allocation2 + $0x187]]
    %v431 = vstv %s430
    %v432 = vmul.f32 %v288, %v431
    %v433 = vmax.f32 %v429, %v432
    %v434 = vrot.slane %v433, 4
    %v435 = vadd.f32 %v433, %v434
    %v436 = vrot.slane %v435, 2
    %v437 = vadd.f32 %v435, %v436
    %v438 = vrot.slane %v437, 1
    %v439 = vadd.f32 %v437, %v438
    %v440 = vmul.f32 %v439, 0.125
    %s441 = sld [smem:[#allocation2 + $0x200]]
    %v442 = vstv %s441
    %v443 = vmul.f32 %v281, %v442
    %s444 = sld [smem:[#allocation2 + $0x201]]
    %v445 = vstv %s444
    %v446 = vmul.f32 %v282, %v445
    %v447 = vmax.f32 %v443, %v446
    %s448 = sld [smem:[#allocation2 + $0x202]]
    %v449 = vstv %s448
    %v450 = vmul.f32 %v283, %v449
    %v451 = vmax.f32 %v447, %v450
    %s452 = sld [smem:[#allocation2 + $0x203]]
    %v453 = vstv %s452
    %v454 = vmul.f32 %v284, %v453
    %v455 = vmax.f32 %v451, %v454
    %s456 = sld [smem:[#allocation2 + $0x204]]
    %v457 = vstv %s456
    %v458 = vmul.f32 %v285, %v457
    %v459 = vmax.f32 %v455, %v458
    %s460 = sld [smem:[#allocation2 + $0x205]]
    %v461 = vstv %s460
    %v462 = vmul.f32 %v286, %v461
    %v463 = vmax.f32 %v459, %v462
    %s464 = sld [smem:[#allocation2 + $0x206]]
    %v465 = vstv %s464
    %v466 = vmul.f32 %v287, %v465
    %v467 = vmax.f32 %v463, %v466
    %s468 = sld [smem:[#allocation2 + $0x207]]
    %v469 = vstv %s468
    %v470 = vmul.f32 %v288, %v469
    %v471 = vmax.f32 %v467, %v470
    %v472 = vrot.slane %v471, 4
    %v473 = vadd.f32 %v471, %v472
    %v474 = vrot.slane %v473, 2
    %v475 = vadd.f32 %v473, %v474
    %v476 = vrot.slane %v475, 1
    %v477 = vadd.f32 %v475, %v476
    %v478 = vmul.f32 %v477, 0.125
    %s479 = sld [smem:[#allocation2 + $0x280]]
    %v480 = vstv %s479
    %v481 = vmul.f32 %v281, %v480
    %s482 = sld [smem:[#allocation2 + $0x281]]
    %v483 = vstv %s482
    %v484 = vmul.f32 %v282, %v483
    %v485 = vmax.f32 %v481, %v484
    %s486 = sld [smem:[#allocation2 + $0x282]]
    %v487 = vstv %s486
    %v488 = vmul.f32 %v283, %v487
    %v489 = vmax.f32 %v485, %v488
    %s490 = sld [smem:[#allocation2 + $0x283]]
    %v491 = vstv %s490
    %v492 = vmul.f32 %v284, %v491
    %v493 = vmax.f32 %v489, %v492
    %s494 = sld [smem:[#allocation2 + $0x284]]
    %v495 = vstv %s494
    %v496 = vmul.f32 %v285, %v495
    %v497 = vmax.f32 %v493, %v496
    %s498 = sld [smem:[#allocation2 + $0x285]]
    %v499 = vstv %s498
    %v500 = vmul.f32 %v286, %v499
    %v501 = vmax.f32 %v497, %v500
    %s502 = sld [smem:[#allocation2 + $0x286]]
    %v503 = vstv %s502
    %v504 = vmul.f32 %v287, %v503
    %v505 = vmax.f32 %v501, %v504
    %s506 = sld [smem:[#allocation2 + $0x287]]
    %v507 = vstv %s506
    %v508 = vmul.f32 %v288, %v507
    %v509 = vmax.f32 %v505, %v508
    %v510 = vrot.slane %v509, 4
    %v511 = vadd.f32 %v509, %v510
    %v512 = vrot.slane %v511, 2
    %v513 = vadd.f32 %v511, %v512
    %v514 = vrot.slane %v513, 1
    %v515 = vadd.f32 %v513, %v514
    %v516 = vmul.f32 %v515, 0.125
    %s517 = sld [smem:[#allocation2 + $0x300]]
    %v518 = vstv %s517
    %v519 = vmul.f32 %v281, %v518
    %s520 = sld [smem:[#allocation2 + $0x301]]
    %v521 = vstv %s520
    %v522 = vmul.f32 %v282, %v521
    %v523 = vmax.f32 %v519, %v522
    %s524 = sld [smem:[#allocation2 + $0x302]]
    %v525 = vstv %s524
    %v526 = vmul.f32 %v283, %v525
    %v527 = vmax.f32 %v523, %v526
    %s528 = sld [smem:[#allocation2 + $0x303]]
    %v529 = vstv %s528
    %v530 = vmul.f32 %v284, %v529
    %v531 = vmax.f32 %v527, %v530
    %s532 = sld [smem:[#allocation2 + $0x304]]
    %v533 = vstv %s532
    %v534 = vmul.f32 %v285, %v533
    %v535 = vmax.f32 %v531, %v534
    %s536 = sld [smem:[#allocation2 + $0x305]]
    %v537 = vstv %s536
    %v538 = vmul.f32 %v286, %v537
    %v539 = vmax.f32 %v535, %v538
    %s540 = sld [smem:[#allocation2 + $0x306]]
    %v541 = vstv %s540
    %v542 = vmul.f32 %v287, %v541
    %v543 = vmax.f32 %v539, %v542
    %s544 = sld [smem:[#allocation2 + $0x307]]
    %v545 = vstv %s544
    %v546 = vmul.f32 %v288, %v545
    %v547 = vmax.f32 %v543, %v546
    %v548 = vrot.slane %v547, 4
    %v549 = vadd.f32 %v547, %v548
    %v550 = vrot.slane %v549, 2
    %v551 = vadd.f32 %v549, %v550
    %v552 = vrot.slane %v551, 1
    %v553 = vadd.f32 %v551, %v552
    %v554 = vmul.f32 %v553, 0.125
    %s555 = sld [smem:[#allocation2 + $0x380]]
    %v556 = vstv %s555
    %v557 = vmul.f32 %v281, %v556
    %s558 = sld [smem:[#allocation2 + $0x381]]
    %v559 = vstv %s558
    %v560 = vmul.f32 %v282, %v559
    %v561 = vmax.f32 %v557, %v560
    %s562 = sld [smem:[#allocation2 + $0x382]]
    %v563 = vstv %s562
    %v564 = vmul.f32 %v283, %v563
    %v565 = vmax.f32 %v561, %v564
    %s566 = sld [smem:[#allocation2 + $0x383]]
    %v567 = vstv %s566
    %v568 = vmul.f32 %v284, %v567
    %v569 = vmax.f32 %v565, %v568
    %s570 = sld [smem:[#allocation2 + $0x384]]
    %v571 = vstv %s570
    %v572 = vmul.f32 %v285, %v571
    %v573 = vmax.f32 %v569, %v572
    %s574 = sld [smem:[#allocation2 + $0x385]]
    %v575 = vstv %s574
    %v576 = vmul.f32 %v286, %v575
    %v577 = vmax.f32 %v573, %v576
    %s578 = sld [smem:[#allocation2 + $0x386]]
    %v579 = vstv %s578
    %v580 = vmul.f32 %v287, %v579
    %v581 = vmax.f32 %v577, %v580
    %s582 = sld [smem:[#allocation2 + $0x387]]
    %v583 = vstv %s582
    %v584 = vmul.f32 %v288, %v583
    %v585 = vmax.f32 %v581, %v584
    %v586 = vrot.slane %v585, 4
    %v587 = vadd.f32 %v585, %v586
    %v588 = vrot.slane %v587, 2
    %v589 = vadd.f32 %v587, %v588
    %v590 = vrot.slane %v589, 1
    %v591 = vadd.f32 %v589, %v590
    %v592 = vmul.f32 %v591, 0.125
    %vm593 = vcmask 1040384
    %v594 = vsel %vm593, %v326, %v364
    %vm595 = vcmask 1041408
    %v596 = vsel %vm595, %v594, %v402
    %vm597 = vcmask 1042432
    %v598 = vsel %vm597, %v596, %v440
    %vm599 = vcmask 1043456
    %v600 = vsel %vm599, %v598, %v478
    %vm601 = vcmask 1044480
    %v602 = vsel %vm601, %v600, %v516
    %vm603 = vcmask 1045504
    %v604 = vsel %vm603, %v602, %v554
    %vm605 = vcmask 1046528
    %v606 = vsel %vm605, %v604, %v592
    %v607 = vld [vmem:[#allocation6] sm:$0xff]
    %v608 = vld [vmem:[#allocation6 + $0x8] sm:$0xff]
    %v609 = vld [vmem:[#allocation6 + $0x10] sm:$0xff]
    %v610 = vld [vmem:[#allocation6 + $0x18] sm:$0xff]
    %v611 = vld [vmem:[#allocation6 + $0x20] sm:$0xff]
    %v612 = vld [vmem:[#allocation6 + $0x28] sm:$0xff]
    %v613 = vld [vmem:[#allocation6 + $0x30] sm:$0xff]
    %v614 = vld [vmem:[#allocation6 + $0x38] sm:$0xff]
    %v615 = vld [vmem:[#allocation6 + $0x40] sm:$0xff]
    %v616 = vld [vmem:[#allocation6 + $0x48] sm:$0xff]
    %v617 = vld [vmem:[#allocation6 + $0x50] sm:$0xff]
    %v618 = vld [vmem:[#allocation6 + $0x58] sm:$0xff]
    %v619 = vld [vmem:[#allocation6 + $0x60] sm:$0xff]
    %v620 = vld [vmem:[#allocation6 + $0x68] sm:$0xff]
    %v621 = vld [vmem:[#allocation6 + $0x70] sm:$0xff]
    %v622 = vld [vmem:[#allocation6 + $0x78] sm:$0xff]
    %v623 = vld [vmem:[#allocation6 + $0x80] sm:$0xff]
    %v624 = vld [vmem:[#allocation6 + $0x88] sm:$0xff]
    %v625 = vld [vmem:[#allocation6 + $0x90] sm:$0xff]
    %v626 = vld [vmem:[#allocation6 + $0x98] sm:$0xff]
    %v627 = vld [vmem:[#allocation6 + $0xa0] sm:$0xff]
    %v628 = vld [vmem:[#allocation6 + $0xa8] sm:$0xff]
    %v629 = vld [vmem:[#allocation6 + $0xb0] sm:$0xff]
    %v630 = vld [vmem:[#allocation6 + $0xb8] sm:$0xff]
    %v631 = vld [vmem:[#allocation6 + $0xc0] sm:$0xff]
    %v632 = vld [vmem:[#allocation6 + $0xc8] sm:$0xff]
    %v633 = vld [vmem:[#allocation6 + $0xd0] sm:$0xff]
    %v634 = vld [vmem:[#allocation6 + $0xd8] sm:$0xff]
    %v635 = vld [vmem:[#allocation6 + $0xe0] sm:$0xff]
    %v636 = vld [vmem:[#allocation6 + $0xe8] sm:$0xff]
    %v637 = vld [vmem:[#allocation6 + $0xf0] sm:$0xff]
    %v638 = vld [vmem:[#allocation6 + $0xf8] sm:$0xff]
    %s639 = scalar_lea.vmem %s5, 1
    %v640 = vld [vmem:[%s639] ss:$4 sm:$0x3]
    %v642 = vlaneseq
    %v643 = vshrl.u32 %v642, 7
    %v644 = vsub.s32 0, %v643
    %v645 = vrot.slane %v640, %v644
    %v646 = vlaneseq
    %v647 = vshrl.u32 %v646, 7
    %v648 = vsub.s32 1, %v647
    %v649 = vrot.slane %v640, %v648
    %652 = vmatprep.subr.mxu0 %v608
    %653 = vmatpush1.msra.mxu0 %v607
    %654 = vmatprep.subr.mxu0 %v610
    %655 = vmatpush1.msra.mxu0 %v609
    %656 = vmatprep.subr.mxu0 %v612
    %657 = vmatpush1.msra.mxu0 %v611
    %658 = vmatprep.subr.mxu0 %v614
    %659 = vmatpush1.msra.mxu0 %v613
    %660 = vmatprep.subr.mxu0 %v616
    %661 = vmatpush1.msra.mxu0 %v615
    %662 = vmatprep.subr.mxu0 %v618
    %663 = vmatpush1.msra.mxu0 %v617
    %664 = vmatprep.subr.mxu0 %v620
    %665 = vmatpush1.msra.mxu0 %v619
    %666 = vmatprep.subr.mxu0 %v622
    %667 = vmatpush1.msra.mxu0 %v621
    %668 = vmatprep.subr.mxu0 %v624
    %669 = vmatpush1.msra.mxu0 %v623
    %670 = vmatprep.subr.mxu0 %v626
    %671 = vmatpush1.msra.mxu0 %v625
    %672 = vmatprep.subr.mxu0 %v628
    %673 = vmatpush1.msra.mxu0 %v627
    %674 = vmatprep.subr.mxu0 %v630
    %675 = vmatpush1.msra.mxu0 %v629
    %676 = vmatprep.subr.mxu0 %v632
    %677 = vmatpush1.msra.mxu0 %v631
    %678 = vmatprep.subr.mxu0 %v634
    %679 = vmatpush1.msra.mxu0 %v633
    %680 = vmatprep.subr.mxu0 %v636
    %681 = vmatpush1.msra.mxu0 %v635
    %682 = vmatprep.subr.mxu0 %v638
    %683 = vmatpush1.msra.mxu0 %v637
    %684 = vmatprep.subr.mxu0 0.0
    %685 = vmatpush1.msra.mxu0 0.0
    %686 = vmatprep.subr.mxu0 0.0
    %687 = vmatpush1.msra.mxu0 0.0
    %688 = vmatprep.subr.mxu0 0.0
    %689 = vmatpush1.msra.mxu0 0.0
    %690 = vmatprep.subr.mxu0 0.0
    %691 = vmatpush1.msra.mxu0 0.0
    %692 = vmatprep.subr.mxu0 0.0
    %693 = vmatpush1.msra.mxu0 0.0
    %694 = vmatprep.subr.mxu0 0.0
    %695 = vmatpush1.msra.mxu0 0.0
    %696 = vmatprep.subr.mxu0 0.0
    %697 = vmatpush1.msra.mxu0 0.0
    %698 = vmatprep.subr.mxu0 0.0
    %699 = vmatpush1.msra.mxu0 0.0
    %700 = vmatprep.subr.mxu0 0.0
    %701 = vmatpush1.msra.mxu0 0.0
    %702 = vmatprep.subr.mxu0 0.0
    %703 = vmatpush1.msra.mxu0 0.0
    %704 = vmatprep.subr.mxu0 0.0
    %705 = vmatpush1.msra.mxu0 0.0
    %706 = vmatprep.subr.mxu0 0.0
    %707 = vmatpush1.msra.mxu0 0.0
    %708 = vmatprep.subr.mxu0 0.0
    %709 = vmatpush1.msra.mxu0 0.0
    %710 = vmatprep.subr.mxu0 0.0
    %711 = vmatpush1.msra.mxu0 0.0
    %712 = vmatprep.subr.mxu0 0.0
    %713 = vmatpush1.msra.mxu0 0.0
    %714 = vmatprep.subr.mxu0 0.0
    %715 = vmatpush1.msra.mxu0 0.0
    %716 = vmatprep.mubr.f32.mxu0 0.0
    %717 = vmatmul.mubr.f32.gmra.mrb[0].mxu0 %v606
    %v718 = vpop.f32.mrb[0].mxu0
    %v719 = vadd.f32 %v645, %v718
    %v720 = vpop.f32.mrb[0].mxu0
    %v721 = vadd.f32 %v649, %v720
    %722 = vdwg.mxu0
    %v723 = vmax.f32 %v719, 0.0
    %v724 = vmax.f32 %v721, 0.0
    %v725 = vmin.f32 %v723, 6.0
    %v726 = vmin.f32 %v724, 6.0
    %s727 = scalar_lea.vmem [#allocation6], 512
    %v728 = vld [vmem:[%s727] sm:$0xff]
    %v729 = vld [vmem:[%s727 + $0x8] sm:$0xff]
    %v730 = vld [vmem:[%s727 + $0x10] sm:$0xff]
    %v731 = vld [vmem:[%s727 + $0x18] sm:$0xff]
    %v732 = vld [vmem:[%s727 + $0x20] sm:$0xff]
    %v733 = vld [vmem:[%s727 + $0x28] sm:$0xff]
    %v734 = vld [vmem:[%s727 + $0x30] sm:$0xff]
    %v735 = vld [vmem:[%s727 + $0x38] sm:$0xff]
    %v736 = vld [vmem:[%s727 + $0x40] sm:$0xff]
    %v737 = vld [vmem:[%s727 + $0x48] sm:$0xff]
    %v738 = vld [vmem:[%s727 + $0x50] sm:$0xff]
    %v739 = vld [vmem:[%s727 + $0x58] sm:$0xff]
    %v740 = vld [vmem:[%s727 + $0x60] sm:$0xff]
    %v741 = vld [vmem:[%s727 + $0x68] sm:$0xff]
    %v742 = vld [vmem:[%s727 + $0x70] sm:$0xff]
    %v743 = vld [vmem:[%s727 + $0x78] sm:$0xff]
    %v744 = vld [vmem:[%s727 + $0x80] sm:$0xff]
    %v745 = vld [vmem:[%s727 + $0x88] sm:$0xff]
    %v746 = vld [vmem:[%s727 + $0x90] sm:$0xff]
    %v747 = vld [vmem:[%s727 + $0x98] sm:$0xff]
    %v748 = vld [vmem:[%s727 + $0xa0] sm:$0xff]
    %v749 = vld [vmem:[%s727 + $0xa8] sm:$0xff]
    %v750 = vld [vmem:[%s727 + $0xb0] sm:$0xff]
    %v751 = vld [vmem:[%s727 + $0xb8] sm:$0xff]
    %v752 = vld [vmem:[%s727 + $0xc0] sm:$0xff]
    %v753 = vld [vmem:[%s727 + $0xc8] sm:$0xff]
    %v754 = vld [vmem:[%s727 + $0xd0] sm:$0xff]
    %v755 = vld [vmem:[%s727 + $0xd8] sm:$0xff]
    %v756 = vld [vmem:[%s727 + $0xe0] sm:$0xff]
    %v757 = vld [vmem:[%s727 + $0xe8] sm:$0xff]
    %v758 = vld [vmem:[%s727 + $0xf0] sm:$0xff]
    %v759 = vld [vmem:[%s727 + $0xf8] sm:$0xff]
    %v760 = vld [vmem:[%s727 + $0x100] sm:$0xff]
    %v761 = vld [vmem:[%s727 + $0x108] sm:$0xff]
    %v762 = vld [vmem:[%s727 + $0x110] sm:$0xff]
    %v763 = vld [vmem:[%s727 + $0x118] sm:$0xff]
    %v764 = vld [vmem:[%s727 + $0x120] sm:$0xff]
    %v765 = vld [vmem:[%s727 + $0x128] sm:$0xff]
    %v766 = vld [vmem:[%s727 + $0x130] sm:$0xff]
    %v767 = vld [vmem:[%s727 + $0x138] sm:$0xff]
    %v768 = vld [vmem:[%s727 + $0x140] sm:$0xff]
    %v769 = vld [vmem:[%s727 + $0x148] sm:$0xff]
    %v770 = vld [vmem:[%s727 + $0x150] sm:$0xff]
    %v771 = vld [vmem:[%s727 + $0x158] sm:$0xff]
    %v772 = vld [vmem:[%s727 + $0x160] sm:$0xff]
    %v773 = vld [vmem:[%s727 + $0x168] sm:$0xff]
    %v774 = vld [vmem:[%s727 + $0x170] sm:$0xff]
    %v775 = vld [vmem:[%s727 + $0x178] sm:$0xff]
    %v776 = vld [vmem:[%s727 + $0x180] sm:$0xff]
    %v777 = vld [vmem:[%s727 + $0x188] sm:$0xff]
    %v778 = vld [vmem:[%s727 + $0x190] sm:$0xff]
    %v779 = vld [vmem:[%s727 + $0x198] sm:$0xff]
    %v780 = vld [vmem:[%s727 + $0x1a0] sm:$0xff]
    %v781 = vld [vmem:[%s727 + $0x1a8] sm:$0xff]
    %v782 = vld [vmem:[%s727 + $0x1b0] sm:$0xff]
    %v783 = vld [vmem:[%s727 + $0x1b8] sm:$0xff]
    %v784 = vld [vmem:[%s727 + $0x1c0] sm:$0xff]
    %v785 = vld [vmem:[%s727 + $0x1c8] sm:$0xff]
    %v786 = vld [vmem:[%s727 + $0x1d0] sm:$0xff]
    %v787 = vld [vmem:[%s727 + $0x1d8] sm:$0xff]
    %v788 = vld [vmem:[%s727 + $0x1e0] sm:$0xff]
    %v789 = vld [vmem:[%s727 + $0x1e8] sm:$0xff]
    %v790 = vld [vmem:[%s727 + $0x1f0] sm:$0xff]
    %v791 = vld [vmem:[%s727 + $0x1f8] sm:$0xff]
    %s792 = scalar_lea.vmem %s5, 2
    %v793 = vld [vmem:[%s792] ss:$4 sm:$0x3]
    %v795 = vlaneseq
    %v796 = vshrl.u32 %v795, 7
    %v797 = vsub.s32 0, %v796
    %v798 = vrot.slane %v793, %v797
    %v799 = vlaneseq
    %v800 = vshrl.u32 %v799, 7
    %v801 = vsub.s32 1, %v800
    %v802 = vrot.slane %v793, %v801
    %805 = vmatprep.subr.mxu0 %v729
    %806 = vmatpush1.msra.mxu0 %v728
    %807 = vmatprep.subr.mxu0 %v731
    %808 = vmatpush1.msra.mxu0 %v730
    %809 = vmatprep.subr.mxu0 %v733
    %810 = vmatpush1.msra.mxu0 %v732
    %811 = vmatprep.subr.mxu0 %v735
    %812 = vmatpush1.msra.mxu0 %v734
    %813 = vmatprep.subr.mxu0 %v737
    %814 = vmatpush1.msra.mxu0 %v736
    %815 = vmatprep.subr.mxu0 %v739
    %816 = vmatpush1.msra.mxu0 %v738
    %817 = vmatprep.subr.mxu0 %v741
    %818 = vmatpush1.msra.mxu0 %v740
    %819 = vmatprep.subr.mxu0 %v743
    %820 = vmatpush1.msra.mxu0 %v742
    %821 = vmatprep.subr.mxu0 %v745
    %822 = vmatpush1.msra.mxu0 %v744
    %823 = vmatprep.subr.mxu0 %v747
    %824 = vmatpush1.msra.mxu0 %v746
    %825 = vmatprep.subr.mxu0 %v749
    %826 = vmatpush1.msra.mxu0 %v748
    %827 = vmatprep.subr.mxu0 %v751
    %828 = vmatpush1.msra.mxu0 %v750
    %829 = vmatprep.subr.mxu0 %v753
    %830 = vmatpush1.msra.mxu0 %v752
    %831 = vmatprep.subr.mxu0 %v755
    %832 = vmatpush1.msra.mxu0 %v754
    %833 = vmatprep.subr.mxu0 %v757
    %834 = vmatpush1.msra.mxu0 %v756
    %835 = vmatprep.subr.mxu0 %v759
    %836 = vmatpush1.msra.mxu0 %v758
    %837 = vmatprep.subr.mxu0 %v761
    %838 = vmatpush1.msra.mxu0 %v760
    %839 = vmatprep.subr.mxu0 %v763
    %840 = vmatpush1.msra.mxu0 %v762
    %841 = vmatprep.subr.mxu0 %v765
    %842 = vmatpush1.msra.mxu0 %v764
    %843 = vmatprep.subr.mxu0 %v767
    %844 = vmatpush1.msra.mxu0 %v766
    %845 = vmatprep.subr.mxu0 %v769
    %846 = vmatpush1.msra.mxu0 %v768
    %847 = vmatprep.subr.mxu0 %v771
    %848 = vmatpush1.msra.mxu0 %v770
    %849 = vmatprep.subr.mxu0 %v773
    %850 = vmatpush1.msra.mxu0 %v772
    %851 = vmatprep.subr.mxu0 %v775
    %852 = vmatpush1.msra.mxu0 %v774
    %853 = vmatprep.subr.mxu0 %v777
    %854 = vmatpush1.msra.mxu0 %v776
    %855 = vmatprep.subr.mxu0 %v779
    %856 = vmatpush1.msra.mxu0 %v778
    %857 = vmatprep.subr.mxu0 %v781
    %858 = vmatpush1.msra.mxu0 %v780
    %859 = vmatprep.subr.mxu0 %v783
    %860 = vmatpush1.msra.mxu0 %v782
    %861 = vmatprep.subr.mxu0 %v785
    %862 = vmatpush1.msra.mxu0 %v784
    %863 = vmatprep.subr.mxu0 %v787
    %864 = vmatpush1.msra.mxu0 %v786
    %865 = vmatprep.subr.mxu0 %v789
    %866 = vmatpush1.msra.mxu0 %v788
    %867 = vmatprep.subr.mxu0 %v791
    %868 = vmatpush1.msra.mxu0 %v790
    %869 = vmatprep.mubr.f32.mxu0 %v726
    %870 = vmatmul.mubr.f32.gmra.mrb[0].mxu0 %v725
    %v871 = vpop.f32.mrb[0].mxu0
    %v872 = vadd.f32 %v798, %v871
    %v873 = vpop.f32.mrb[0].mxu0
    %v874 = vadd.f32 %v802, %v873
    %875 = vdwg.mxu0
    %v876 = vmax.f32 %v872, 0.0
    %v877 = vmax.f32 %v874, 0.0
    %v878 = vmin.f32 %v876, 6.0
    %v879 = vmin.f32 %v877, 6.0
    %s880 = scalar_lea.vmem [#allocation6], 1024
    %v881 = vld [vmem:[%s880] sm:$0xff]
    %v882 = vld [vmem:[%s880 + $0x8] sm:$0xff]
    %v883 = vld [vmem:[%s880 + $0x10] sm:$0xff]
    %v884 = vld [vmem:[%s880 + $0x18] sm:$0xff]
    %v885 = vld [vmem:[%s880 + $0x20] sm:$0xff]
    %v886 = vld [vmem:[%s880 + $0x28] sm:$0xff]
    %v887 = vld [vmem:[%s880 + $0x30] sm:$0xff]
    %v888 = vld [vmem:[%s880 + $0x38] sm:$0xff]
    %v889 = vld [vmem:[%s880 + $0x40] sm:$0xff]
    %v890 = vld [vmem:[%s880 + $0x48] sm:$0xff]
    %v891 = vld [vmem:[%s880 + $0x50] sm:$0xff]
    %v892 = vld [vmem:[%s880 + $0x58] sm:$0xff]
    %v893 = vld [vmem:[%s880 + $0x60] sm:$0xff]
    %v894 = vld [vmem:[%s880 + $0x68] sm:$0xff]
    %v895 = vld [vmem:[%s880 + $0x70] sm:$0xff]
    %v896 = vld [vmem:[%s880 + $0x78] sm:$0xff]
    %v897 = vld [vmem:[%s880 + $0x80] sm:$0xff]
    %v898 = vld [vmem:[%s880 + $0x88] sm:$0xff]
    %v899 = vld [vmem:[%s880 + $0x90] sm:$0xff]
    %v900 = vld [vmem:[%s880 + $0x98] sm:$0xff]
    %v901 = vld [vmem:[%s880 + $0xa0] sm:$0xff]
    %v902 = vld [vmem:[%s880 + $0xa8] sm:$0xff]
    %v903 = vld [vmem:[%s880 + $0xb0] sm:$0xff]
    %v904 = vld [vmem:[%s880 + $0xb8] sm:$0xff]
    %v905 = vld [vmem:[%s880 + $0xc0] sm:$0xff]
    %v906 = vld [vmem:[%s880 + $0xc8] sm:$0xff]
    %v907 = vld [vmem:[%s880 + $0xd0] sm:$0xff]
    %v908 = vld [vmem:[%s880 + $0xd8] sm:$0xff]
    %v909 = vld [vmem:[%s880 + $0xe0] sm:$0xff]
    %v910 = vld [vmem:[%s880 + $0xe8] sm:$0xff]
    %v911 = vld [vmem:[%s880 + $0xf0] sm:$0xff]
    %v912 = vld [vmem:[%s880 + $0xf8] sm:$0xff]
    %v913 = vld [vmem:[%s880 + $0x100] sm:$0xff]
    %v914 = vld [vmem:[%s880 + $0x108] sm:$0xff]
    %v915 = vld [vmem:[%s880 + $0x110] sm:$0xff]
    %v916 = vld [vmem:[%s880 + $0x118] sm:$0xff]
    %v917 = vld [vmem:[%s880 + $0x120] sm:$0xff]
    %v918 = vld [vmem:[%s880 + $0x128] sm:$0xff]
    %v919 = vld [vmem:[%s880 + $0x130] sm:$0xff]
    %v920 = vld [vmem:[%s880 + $0x138] sm:$0xff]
    %v921 = vld [vmem:[%s880 + $0x140] sm:$0xff]
    %v922 = vld [vmem:[%s880 + $0x148] sm:$0xff]
    %v923 = vld [vmem:[%s880 + $0x150] sm:$0xff]
    %v924 = vld [vmem:[%s880 + $0x158] sm:$0xff]
    %v925 = vld [vmem:[%s880 + $0x160] sm:$0xff]
    %v926 = vld [vmem:[%s880 + $0x168] sm:$0xff]
    %v927 = vld [vmem:[%s880 + $0x170] sm:$0xff]
    %v928 = vld [vmem:[%s880 + $0x178] sm:$0xff]
    %v929 = vld [vmem:[%s880 + $0x180] sm:$0xff]
    %v930 = vld [vmem:[%s880 + $0x188] sm:$0xff]
    %v931 = vld [vmem:[%s880 + $0x190] sm:$0xff]
    %v932 = vld [vmem:[%s880 + $0x198] sm:$0xff]
    %v933 = vld [vmem:[%s880 + $0x1a0] sm:$0xff]
    %v934 = vld [vmem:[%s880 + $0x1a8] sm:$0xff]
    %v935 = vld [vmem:[%s880 + $0x1b0] sm:$0xff]
    %v936 = vld [vmem:[%s880 + $0x1b8] sm:$0xff]
    %v937 = vld [vmem:[%s880 + $0x1c0] sm:$0xff]
    %v938 = vld [vmem:[%s880 + $0x1c8] sm:$0xff]
    %v939 = vld [vmem:[%s880 + $0x1d0] sm:$0xff]
    %v940 = vld [vmem:[%s880 + $0x1d8] sm:$0xff]
    %v941 = vld [vmem:[%s880 + $0x1e0] sm:$0xff]
    %v942 = vld [vmem:[%s880 + $0x1e8] sm:$0xff]
    %v943 = vld [vmem:[%s880 + $0x1f0] sm:$0xff]
    %v944 = vld [vmem:[%s880 + $0x1f8] sm:$0xff]
    %s945 = scalar_lea.vmem %s5, 3
    %v946 = vld [vmem:[%s945] ss:$4 sm:$0x3]
    %v948 = vlaneseq
    %v949 = vshrl.u32 %v948, 7
    %v950 = vsub.s32 0, %v949
    %v951 = vrot.slane %v946, %v950
    %v952 = vlaneseq
    %v953 = vshrl.u32 %v952, 7
    %v954 = vsub.s32 1, %v953
    %v955 = vrot.slane %v946, %v954
    %958 = vmatprep.subr.mxu0 %v882
    %959 = vmatpush1.msra.mxu0 %v881
    %960 = vmatprep.subr.mxu0 %v884
    %961 = vmatpush1.msra.mxu0 %v883
    %962 = vmatprep.subr.mxu0 %v886
    %963 = vmatpush1.msra.mxu0 %v885
    %964 = vmatprep.subr.mxu0 %v888
    %965 = vmatpush1.msra.mxu0 %v887
    %966 = vmatprep.subr.mxu0 %v890
    %967 = vmatpush1.msra.mxu0 %v889
    %968 = vmatprep.subr.mxu0 %v892
    %969 = vmatpush1.msra.mxu0 %v891
    %970 = vmatprep.subr.mxu0 %v894
    %971 = vmatpush1.msra.mxu0 %v893
    %972 = vmatprep.subr.mxu0 %v896
    %973 = vmatpush1.msra.mxu0 %v895
    %974 = vmatprep.subr.mxu0 %v898
    %975 = vmatpush1.msra.mxu0 %v897
    %976 = vmatprep.subr.mxu0 %v900
    %977 = vmatpush1.msra.mxu0 %v899
    %978 = vmatprep.subr.mxu0 %v902
    %979 = vmatpush1.msra.mxu0 %v901
    %980 = vmatprep.subr.mxu0 %v904
    %981 = vmatpush1.msra.mxu0 %v903
    %982 = vmatprep.subr.mxu0 %v906
    %983 = vmatpush1.msra.mxu0 %v905
    %984 = vmatprep.subr.mxu0 %v908
    %985 = vmatpush1.msra.mxu0 %v907
    %986 = vmatprep.subr.mxu0 %v910
    %987 = vmatpush1.msra.mxu0 %v909
    %988 = vmatprep.subr.mxu0 %v912
    %989 = vmatpush1.msra.mxu0 %v911
    %990 = vmatprep.subr.mxu0 %v914
    %991 = vmatpush1.msra.mxu0 %v913
    %992 = vmatprep.subr.mxu0 %v916
    %993 = vmatpush1.msra.mxu0 %v915
    %994 = vmatprep.subr.mxu0 %v918
    %995 = vmatpush1.msra.mxu0 %v917
    %996 = vmatprep.subr.mxu0 %v920
    %997 = vmatpush1.msra.mxu0 %v919
    %998 = vmatprep.subr.mxu0 %v922
    %999 = vmatpush1.msra.mxu0 %v921
    %1000 = vmatprep.subr.mxu0 %v924
    %1001 = vmatpush1.msra.mxu0 %v923
    %1002 = vmatprep.subr.mxu0 %v926
    %1003 = vmatpush1.msra.mxu0 %v925
    %1004 = vmatprep.subr.mxu0 %v928
    %1005 = vmatpush1.msra.mxu0 %v927
    %1006 = vmatprep.subr.mxu0 %v930
    %1007 = vmatpush1.msra.mxu0 %v929
    %1008 = vmatprep.subr.mxu0 %v932
    %1009 = vmatpush1.msra.mxu0 %v931
    %1010 = vmatprep.subr.mxu0 %v934
    %1011 = vmatpush1.msra.mxu0 %v933
    %1012 = vmatprep.subr.mxu0 %v936
    %1013 = vmatpush1.msra.mxu0 %v935
    %1014 = vmatprep.subr.mxu0 %v938
    %1015 = vmatpush1.msra.mxu0 %v937
    %1016 = vmatprep.subr.mxu0 %v940
    %1017 = vmatpush1.msra.mxu0 %v939
    %1018 = vmatprep.subr.mxu0 %v942
    %1019 = vmatpush1.msra.mxu0 %v941
    %1020 = vmatprep.subr.mxu0 %v944
    %1021 = vmatpush1.msra.mxu0 %v943
    %1022 = vmatprep.mubr.f32.mxu0 %v879
    %1023 = vmatmul.mubr.f32.gmra.mrb[0].mxu0 %v878
    %v1024 = vpop.f32.mrb[0].mxu0
    %v1025 = vadd.f32 %v951, %v1024
    %v1026 = vpop.f32.mrb[0].mxu0
    %v1027 = vadd.f32 %v955, %v1026
    %1028 = vdwg.mxu0
    %v1029 = vmax.f32 %v1025, 0.0
    %v1030 = vmax.f32 %v1027, 0.0
    %v1031 = vmin.f32 %v1029, 6.0
    %v1032 = vmin.f32 %v1030, 6.0
    %v1033 = vld [vmem:[%s2] sm:$0xff]
    %v1034 = vmul.f32 %v1032, 0.5
    %v1035 = vmul.f32 %v1034, 1.442695
    %v1036 = vpow.pop %v1035
    %v1037 = vmul.f32 %v1033, %v1036
    %v1038 = vadd.f32 %v1037, %v1031
    %1039 = vst [vmem:[#allocation7] sm:$0xff] %v1038
    %s1040 = scalar_lea.vmem [#allocation7], 8
    %1041 = vst [vmem:[%s1040] sm:$0xff] %v1031
    %s1042 = scalar_lea.vmem [#allocation7], 16
    %1043 = vst [vmem:[%s1042] sm:$0xff] %v1032
    // Predicated region
    $region34: #{tpu_custom_call.1} parent=1 // pred_check
      _
    $region35: #{tpu_custom_call.1} parent=1 // pred_check_branch
      %1045 = sbr.rel (0) target = $region37
    $region36: #{tpu_custom_call.1} parent=1 // pred_region
      %s1047 = ssub.s32 384, 384
      %1048 = vsyncadd [#allocation4], %s1047
      %s1049 = sshll.u32 [#allocation7], 4
      %s1050 = int_to_ptr.vmem [resolvable:$true] %s1049
      %1055 = dma.vmem_to_hbm [thread:$0]  %s1050, 384, %s6, [#allocation4], 128, 128, 8
    $region37: #{tpu_custom_call.1} parent=1 // pred_fallthru
      _
    // Predicated region
    $region38: #{tpu_custom_call.1} parent=1 // pred_check
      _
    $region39: #{tpu_custom_call.1} parent=1 // pred_check_branch
      %1057 = sbr.rel (0) target = $region41
    $region40: #{tpu_custom_call.1} parent=1 // pred_region
      %1058 = dma.done [#allocation4], 384
    $region41: #{tpu_custom_call.1} parent=1 // pred_fallthru
      _
    %1059 = vsyncpa [#allocation3], 1
    %1060 = vsyncpa [#allocation4], 1
    %1061 = vsyncpa [#allocation5], 1

</llo_original>
